<compile_context>
chip_gen: v5e
topology: v5e:2x2
jax: 0.10.0
libtpu: 0.0.40
codegen_flags: <defaults>
</compile_context>

<pallas_src>
import jax
import jax.numpy as jnp
from jax import lax
from jax.experimental import pallas as pl
from jax.experimental.pallas import tpu as pltpu

K = 7          # conv kernel size (torch module default)
PAD = 3        # padding = 3 for kernel_size 7


def _round_up(v, m):
    return ((v + m - 1) // m) * m


def _vmem_capacity_bytes(default=64 * 1024 * 1024):
    """Physical VMEM bytes of the local TPU; conservative fallback (v7x)."""
    try:
        return int(pltpu.get_tpu_info().vmem_capacity_bytes)
    except Exception:
        return default


def _make_kernel(C, cc, WS, WOUT):
    """Builds the kernel with static C / chunk-size / plane-width baked in."""

    def spatial_attention_kernel(w_ref, x_ref, o_ref, sum_sc, max_sc, pad_sc):
        # w_ref  : (2*K*K,) f32 conv weights in SMEM (1/C folded into ch 0)
        # x_ref  : (1, cc, H, W) VMEM block (one C-chunk of one batch element)
        # o_ref  : (1, H, WOUT) VMEM output block (lane-dense; wrapper slices :W)
        # sum_sc : (H, W) f32 running channel sum
        # max_sc : (H, W) f32 running channel max
        # pad_sc : (2, HP, WS) f32 zero-padded reduced planes (avg-sum, max)
        _, _, H, W = x_ref.shape

        ci = pl.program_id(1)
        nc = pl.num_programs(1)

        @pl.when(ci == 0)
        def _init():
            sum_sc[...] = jnp.zeros_like(sum_sc)
            max_sc[...] = jnp.full_like(max_sc, -jnp.inf)

        # ---- incremental channel reduction over this C-chunk (VPU) ---------
        # Last chunk may be ragged: only [0, valid) channels of the block are
        # real data (out-of-bounds block contents are unspecified), so bound
        # the loop at `valid` instead of masking.
        valid = jnp.minimum(cc, C - ci * cc)

        def red_body(i, carry):
            s, m = carry
            row = x_ref[0, i].astype(jnp.float32)           # (H, W)
            return s + row, jnp.maximum(m, row)

        s, m = lax.fori_loop(0, valid, red_body, (sum_sc[...], max_sc[...]))
        sum_sc[...] = s
        max_sc[...] = m

        # ---- last C-chunk: 7x7 two-channel conv + sigmoid -------------------
        @pl.when(ci == nc - 1)
        def _finalize():
            # Zero-padded planes: data at rows [PAD, PAD+H), cols [0, W);
            # everything else (top/bottom border rows and cols >= W, which the
            # circular kw-roll wraps into) stays exactly zero = conv padding.
            pad_sc[...] = jnp.zeros_like(pad_sc)
            pad_sc[0, pl.ds(PAD, H), pl.ds(0, W)] = sum_sc[...]   # mean (scale in w)
            pad_sc[1, pl.ds(PAD, H), pl.ds(0, W)] = max_sc[...]   # max

            conv = None
            for c in range(2):
                acc = jnp.zeros((H, WOUT), jnp.float32)      # one acc per channel
                for kh in range(K):
                    # 14 sublane-offset reads total; kw shifts stay on the XLU
                    # as value rolls (no VMEM round-trip).
                    slab = pad_sc[c, pl.ds(kh, H), pl.ds(0, WS)]   # (H, WS)
                    for kw in range(K):
                        wv = w_ref[c * K * K + kh * K + kw]        # scalar (SMEM)
                        if kw == PAD:
                            tap = slab[:, :WOUT]
                        else:
                            tap = pltpu.roll(
                                slab, shift=(PAD - kw) % WS, axis=1)[:, :WOUT]
                        acc = acc + wv * tap
                conv = acc if conv is None else conv + acc
            o_ref[0] = jax.nn.sigmoid(conv).astype(o_ref.dtype)

    return spatial_attention_kernel


def spatial_attention(x, w):
    """x: (N, C, H, W), w: (1, 2, K, K) conv weight (no bias). Returns (N, 1, H, W)."""
    N, C, H, W = x.shape
    assert w.shape == (1, 2, K, K)

    WOUT = _round_up(W, 128)                                    # lane-dense output
    WS = WOUT if (W + 2 * PAD) <= WOUT else _round_up(W + 2 * PAD, 128)
    HP = _round_up(H + 2 * PAD, 8)
    # Conv border correctness relies on >= PAD zero columns past the data.
    assert W + 2 * PAD <= WS and WOUT <= WS

    # Fold 1/C of the channel-mean into the avg-channel conv weights so the
    # kernel only needs a plain channel sum.
    w32 = w.astype(jnp.float32)
    w_scaled = w32 * jnp.array([1.0 / C, 1.0], jnp.float32).reshape(1, 2, 1, 1)
    w_flat = w_scaled.reshape(-1)                               # (2*K*K,)

    # --- C-chunk sizing (generation aware) ---------------------------------
    # Budget ~ VMEM/8 per block (8 MiB on v7x, 16 MiB on v5e/v6e), measured in
    # *padded* VMEM bytes per channel plane; cdiv grid so any C works.
    vmem_cap = _vmem_capacity_bytes()
    budget = max(2 << 20, min(16 << 20, vmem_cap // 8))
    plane_vmem_bytes = _round_up(H, 8) * _round_up(W, 128) * x.dtype.itemsize
    cc = int(max(1, min(C, budget // max(1, plane_vmem_bytes))))
    nc = int(pl.cdiv(C, cc))

    out_vmem_bytes = _round_up(H, 8) * WOUT * x.dtype.itemsize
    scratch_bytes = (2 * _round_up(H, 8) * _round_up(W, 128) + 2 * HP * WS) * 4
    vmem_limit = int(min(vmem_cap,
                         2 * cc * plane_vmem_bytes      # double-buffered input
                         + 2 * out_vmem_bytes           # double-buffered output
                         + scratch_bytes
                         + (8 << 20)))                  # headroom / internal scratch

    kernel = _make_kernel(C, cc, WS, WOUT)

    out = pl.pallas_call(
        kernel,
        out_shape=jax.ShapeDtypeStruct((N, H, WOUT), x.dtype),
        grid_spec=pltpu.PrefetchScalarGridSpec(
            num_scalar_prefetch=0,
            grid=(N, nc),
            in_specs=[
                pl.BlockSpec(memory_space=pltpu.MemorySpace.SMEM),          # weights
                # Natural-width input block: last two dims == full array dims.
                pl.BlockSpec((1, cc, H, W), lambda n, c: (n, c, 0, 0)),
            ],
            out_specs=pl.BlockSpec((1, H, WOUT), lambda n, c: (n, 0, 0)),
            scratch_shapes=[
                pltpu.VMEM((H, W), jnp.float32),        # running channel sum
                pltpu.VMEM((H, W), jnp.float32),        # running channel max
                pltpu.VMEM((2, HP, WS), jnp.float32),   # zero-padded planes
            ]),
        compiler_params=pltpu.CompilerParams(
            dimension_semantics=("parallel", "arbitrary"),
            vmem_limit_bytes=vmem_limit),
    )(w_flat, x)

    return out[:, None, :, :W]


if __name__ == "__main__":
    key = jax.random.PRNGKey(0)
    kx, kw = jax.random.split(key)

    N, C, H, W = 2, 4, 16, 16
    x = jax.random.normal(kx, (N, C, H, W), dtype=jnp.float32)
    # Deterministic synthetic init for conv1.weight (shape (1, 2, 7, 7), no bias).
    w = jax.random.normal(kw, (1, 2, K, K), dtype=jnp.float32) * 0.1

    out = spatial_attention(x, w)
    out = jax.block_until_ready(out)

    # Pure-JAX reference (mirrors the PyTorch forward exactly).
    avg = jnp.mean(x, axis=1, keepdims=True)
    mx = jnp.max(x, axis=1, keepdims=True)
    cat = jnp.concatenate([avg, mx], axis=1)
    conv = lax.conv_general_dilated(
        cat, w, window_strides=(1, 1), padding=[(PAD, PAD), (PAD, PAD)],
        dimension_numbers=("NCHW", "OIHW", "NCHW"))
    ref = jax.nn.sigmoid(conv)

    assert out.shape == (N, 1, H, W)
    assert jnp.allclose(out, ref, atol=1e-5, rtol=1e-5)
    print("KERNEL_OK")
</pallas_src>

<mosaic_0001>
module attributes {stable_mosaic.version = 11 : i64} {
  func.func @spatial_attention_kernel(%arg0: i32, %arg1: i32, %arg2: memref<98xf32, #tpu.memory_space<smem>>, %arg3: memref<1x4x16x16xf32, #tpu.memory_space<vmem>>, %arg4: memref<1x16x128xf32, #tpu.memory_space<vmem>>, %arg5: memref<16x16xf32, #tpu.memory_space<vmem>>, %arg6: memref<16x16xf32, #tpu.memory_space<vmem>>, %arg7: memref<2x24x128xf32, #tpu.memory_space<vmem>>) attributes {dimension_semantics = [#tpu.dimension_semantics<parallel>, #tpu.dimension_semantics<arbitrary>], iteration_bounds = array<i64: 2, 1>, scalar_prefetch = 0 : i64, scratch_operands = 3 : i64, tpu.core_type = #tpu.core_type<tc>, window_params = [{transform_indices = @transform_0, window_bounds = array<i64: 98>}, {transform_indices = @transform_1, window_bounds = array<i64: 1, 4, 16, 16>}, {transform_indices = @transform_2, window_bounds = array<i64: 1, 16, 128>}]} {
    %c0_i32 = arith.constant 0 : i32
    %0 = arith.cmpi eq, %arg1, %c0_i32 : i32
    %1 = arith.extui %0 : i1 to i32
    %c0_i32_0 = arith.constant 0 : i32
    %2 = arith.cmpi ne, %1, %c0_i32_0 : i32
    scf.if %2 {
      %cst = arith.constant 0.000000e+00 : f32
      %16 = vector.broadcast %cst : f32 to vector<16x16xf32>
      %c0_13 = arith.constant 0 : index
      %c0_14 = arith.constant 0 : index
      %17 = vector.load %arg5[%c0_13, %c0_14] : memref<16x16xf32, #tpu.memory_space<vmem>>, vector<16x16xf32>
      tpu.vector_store %arg5[%c0_13, %c0_14], %16 {strides = array<i32>} : memref<16x16xf32, #tpu.memory_space<vmem>>, vector<16x16xf32>,
      %cst_15 = arith.constant 0xFF800000 : f32
      %18 = vector.broadcast %cst_15 : f32 to vector<16x16xf32>
      %c0_16 = arith.constant 0 : index
      %c0_17 = arith.constant 0 : index
      %19 = vector.load %arg6[%c0_16, %c0_17] : memref<16x16xf32, #tpu.memory_space<vmem>>, vector<16x16xf32>
      tpu.vector_store %arg6[%c0_16, %c0_17], %18 {strides = array<i32>} : memref<16x16xf32, #tpu.memory_space<vmem>>, vector<16x16xf32>,
    } else {
    }
    %c4_i32 = arith.constant 4 : i32
    %3 = arith.muli %arg1, %c4_i32 : i32
    %c4_i32_1 = arith.constant 4 : i32
    %4 = arith.subi %c4_i32_1, %3 : i32
    %c4_i32_2 = arith.constant 4 : i32
    %5 = arith.minsi %c4_i32_2, %4 : i32
    %c0 = arith.constant 0 : index
    %c0_3 = arith.constant 0 : index
    %6 = vector.load %arg5[%c0, %c0_3] : memref<16x16xf32, #tpu.memory_space<vmem>>, vector<16x16xf32>
    %c0_4 = arith.constant 0 : index
    %c0_5 = arith.constant 0 : index
    %7 = vector.load %arg6[%c0_4, %c0_5] : memref<16x16xf32, #tpu.memory_space<vmem>>, vector<16x16xf32>
    %c0_i32_6 = arith.constant 0 : i32
    %8 = arith.subi %5, %c0_i32_6 : i32
    %9 = arith.addi %c0_i32_6, %8 : i32
    %c1_i32 = arith.constant 1 : i32
    %10:2 = scf.for %arg8 = %c0_i32_6 to %9 step %c1_i32 iter_args(%arg9 = %6, %arg10 = %7) -> (vector<16x16xf32>, vector<16x16xf32>)  : i32 {
      %c0_13 = arith.constant 0 : index
      %16 = arith.index_cast %arg8 : i32 to index
      %c0_14 = arith.constant 0 : index
      %c0_15 = arith.constant 0 : index
      %17 = vector.load %arg3[%c0_13, %16, %c0_14, %c0_15] : memref<1x4x16x16xf32, #tpu.memory_space<vmem>>, vector<1x1x16x16xf32>
      %18 = vector.shape_cast %17 : vector<1x1x16x16xf32> to vector<16x16xf32>
      %19 = arith.addf %arg9, %18 : vector<16x16xf32>
      %20 = arith.maximumf %arg10, %18 : vector<16x16xf32>
      scf.yield %19, %20 : vector<16x16xf32>, vector<16x16xf32>
    }
    %c0_7 = arith.constant 0 : index
    %c0_8 = arith.constant 0 : index
    %11 = vector.load %arg5[%c0_7, %c0_8] : memref<16x16xf32, #tpu.memory_space<vmem>>, vector<16x16xf32>
    tpu.vector_store %arg5[%c0_7, %c0_8], %10#0 {strides = array<i32>} : memref<16x16xf32, #tpu.memory_space<vmem>>, vector<16x16xf32>,
    %c0_9 = arith.constant 0 : index
    %c0_10 = arith.constant 0 : index
    %12 = vector.load %arg6[%c0_9, %c0_10] : memref<16x16xf32, #tpu.memory_space<vmem>>, vector<16x16xf32>
    tpu.vector_store %arg6[%c0_9, %c0_10], %10#1 {strides = array<i32>} : memref<16x16xf32, #tpu.memory_space<vmem>>, vector<16x16xf32>,
    %c0_i32_11 = arith.constant 0 : i32
    %13 = arith.cmpi eq, %arg1, %c0_i32_11 : i32
    %14 = arith.extui %13 : i1 to i32
    %c0_i32_12 = arith.constant 0 : i32
    %15 = arith.cmpi ne, %14, %c0_i32_12 : i32
    scf.if %15 {
      %cst = arith.constant 0.000000e+00 : f32
      %16 = vector.broadcast %cst : f32 to vector<2x24x128xf32>
      %c0_13 = arith.constant 0 : index
      %c0_14 = arith.constant 0 : index
      %c0_15 = arith.constant 0 : index
      %17 = vector.load %arg7[%c0_13, %c0_14, %c0_15] : memref<2x24x128xf32, #tpu.memory_space<vmem>>, vector<2x24x128xf32>
      tpu.vector_store %arg7[%c0_13, %c0_14, %c0_15], %16 {strides = array<i32>} : memref<2x24x128xf32, #tpu.memory_space<vmem>>, vector<2x24x128xf32>,
      %c0_16 = arith.constant 0 : index
      %c0_17 = arith.constant 0 : index
      %18 = vector.load %arg5[%c0_16, %c0_17] : memref<16x16xf32, #tpu.memory_space<vmem>>, vector<16x16xf32>
      %c0_18 = arith.constant 0 : index
      %c3 = arith.constant 3 : index
      %c0_19 = arith.constant 0 : index
      %19 = vector.load %arg7[%c0_18, %c3, %c0_19] : memref<2x24x128xf32, #tpu.memory_space<vmem>>, vector<1x16x16xf32>
      %20 = vector.shape_cast %19 : vector<1x16x16xf32> to vector<16x16xf32>
      %21 = vector.shape_cast %18 : vector<16x16xf32> to vector<1x16x16xf32>
      tpu.vector_store %arg7[%c0_18, %c3, %c0_19], %21 {strides = array<i32>} : memref<2x24x128xf32, #tpu.memory_space<vmem>>, vector<1x16x16xf32>,
      %c0_20 = arith.constant 0 : index
      %c0_21 = arith.constant 0 : index
      %22 = vector.load %arg6[%c0_20, %c0_21] : memref<16x16xf32, #tpu.memory_space<vmem>>, vector<16x16xf32>
      %c1 = arith.constant 1 : index
      %c3_22 = arith.constant 3 : index
      %c0_23 = arith.constant 0 : index
      %23 = vector.load %arg7[%c1, %c3_22, %c0_23] : memref<2x24x128xf32, #tpu.memory_space<vmem>>, vector<1x16x16xf32>
      %24 = vector.shape_cast %23 : vector<1x16x16xf32> to vector<16x16xf32>
      %25 = vector.shape_cast %22 : vector<16x16xf32> to vector<1x16x16xf32>
      tpu.vector_store %arg7[%c1, %c3_22, %c0_23], %25 {strides = array<i32>} : memref<2x24x128xf32, #tpu.memory_space<vmem>>, vector<1x16x16xf32>,
      %cst_24 = arith.constant 0.000000e+00 : f32
      %26 = vector.broadcast %cst_24 : f32 to vector<16x128xf32>
      %c0_25 = arith.constant 0 : index
      %c0_26 = arith.constant 0 : index
      %c0_27 = arith.constant 0 : index
      %27 = vector.load %arg7[%c0_25, %c0_26, %c0_27] : memref<2x24x128xf32, #tpu.memory_space<vmem>>, vector<1x16x128xf32>
      %28 = vector.shape_cast %27 : vector<1x16x128xf32> to vector<16x128xf32>
      %c0_28 = arith.constant 0 : index
      %29 = memref.load %arg2[%c0_28] : memref<98xf32, #tpu.memory_space<smem>>
      %c3_i32 = arith.constant 3 : i32
      %30 = tpu.dynamic_rotate %28 by %c3_i32 dim 1 : vector<16x128xf32>, i32 -> vector<16x128xf32>
      %31 = vector.broadcast %29 : f32 to vector<16x128xf32>
      %32 = arith.mulf %31, %30 : vector<16x128xf32>
      %33 = arith.addf %26, %32 : vector<16x128xf32>
      %c1_29 = arith.constant 1 : index
      %34 = memref.load %arg2[%c1_29] : memref<98xf32, #tpu.memory_space<smem>>
      %c2_i32 = arith.constant 2 : i32
      %35 = tpu.dynamic_rotate %28 by %c2_i32 dim 1 : vector<16x128xf32>, i32 -> vector<16x128xf32>
      %36 = vector.broadcast %34 : f32 to vector<16x128xf32>
      %37 = arith.mulf %36, %35 : vector<16x128xf32>
      %38 = arith.addf %33, %37 : vector<16x128xf32>
      %c2 = arith.constant 2 : index
      %39 = memref.load %arg2[%c2] : memref<98xf32, #tpu.memory_space<smem>>
      %c1_i32_30 = arith.constant 1 : i32
      %40 = tpu.dynamic_rotate %28 by %c1_i32_30 dim 1 : vector<16x128xf32>, i32 -> vector<16x128xf32>
      %41 = vector.broadcast %39 : f32 to vector<16x128xf32>
      %42 = arith.mulf %41, %40 : vector<16x128xf32>
      %43 = arith.addf %38, %42 : vector<16x128xf32>
      %c3_31 = arith.constant 3 : index
      %44 = memref.load %arg2[%c3_31] : memref<98xf32, #tpu.memory_space<smem>>
      %45 = vector.broadcast %44 : f32 to vector<16x128xf32>
      %46 = arith.mulf %45, %28 : vector<16x128xf32>
      %47 = arith.addf %43, %46 : vector<16x128xf32>
      %c4 = arith.constant 4 : index
      %48 = memref.load %arg2[%c4] : memref<98xf32, #tpu.memory_space<smem>>
      %c127_i32 = arith.constant 127 : i32
      %49 = tpu.dynamic_rotate %28 by %c127_i32 dim 1 : vector<16x128xf32>, i32 -> vector<16x128xf32>
      %50 = vector.broadcast %48 : f32 to vector<16x128xf32>
      %51 = arith.mulf %50, %49 : vector<16x128xf32>
      %52 = arith.addf %47, %51 : vector<16x128xf32>
      %c5 = arith.constant 5 : index
      %53 = memref.load %arg2[%c5] : memref<98xf32, #tpu.memory_space<smem>>
      %c126_i32 = arith.constant 126 : i32
      %54 = tpu.dynamic_rotate %28 by %c126_i32 dim 1 : vector<16x128xf32>, i32 -> vector<16x128xf32>
      %55 = vector.broadcast %53 : f32 to vector<16x128xf32>
      %56 = arith.mulf %55, %54 : vector<16x128xf32>
      %57 = arith.addf %52, %56 : vector<16x128xf32>
      %c6 = arith.constant 6 : index
      %58 = memref.load %arg2[%c6] : memref<98xf32, #tpu.memory_space<smem>>
      %c125_i32 = arith.constant 125 : i32
      %59 = tpu.dynamic_rotate %28 by %c125_i32 dim 1 : vector<16x128xf32>, i32 -> vector<16x128xf32>
      %60 = vector.broadcast %58 : f32 to vector<16x128xf32>
      %61 = arith.mulf %60, %59 : vector<16x128xf32>
      %62 = arith.addf %57, %61 : vector<16x128xf32>
      %c0_32 = arith.constant 0 : index
      %c1_33 = arith.constant 1 : index
      %c0_34 = arith.constant 0 : index
      %63 = vector.load %arg7[%c0_32, %c1_33, %c0_34] : memref<2x24x128xf32, #tpu.memory_space<vmem>>, vector<1x16x128xf32>
      %64 = vector.shape_cast %63 : vector<1x16x128xf32> to vector<16x128xf32>
      %c7 = arith.constant 7 : index
      %65 = memref.load %arg2[%c7] : memref<98xf32, #tpu.memory_space<smem>>
      %c3_i32_35 = arith.constant 3 : i32
      %66 = tpu.dynamic_rotate %64 by %c3_i32_35 dim 1 : vector<16x128xf32>, i32 -> vector<16x128xf32>
      %67 = vector.broadcast %65 : f32 to vector<16x128xf32>
      %68 = arith.mulf %67, %66 : vector<16x128xf32>
      %69 = arith.addf %62, %68 : vector<16x128xf32>
      %c8 = arith.constant 8 : index
      %70 = memref.load %arg2[%c8] : memref<98xf32, #tpu.memory_space<smem>>
      %c2_i32_36 = arith.constant 2 : i32
      %71 = tpu.dynamic_rotate %64 by %c2_i32_36 dim 1 : vector<16x128xf32>, i32 -> vector<16x128xf32>
      %72 = vector.broadcast %70 : f32 to vector<16x128xf32>
      %73 = arith.mulf %72, %71 : vector<16x128xf32>
      %74 = arith.addf %69, %73 : vector<16x128xf32>
      %c9 = arith.constant 9 : index
      %75 = memref.load %arg2[%c9] : memref<98xf32, #tpu.memory_space<smem>>
      %c1_i32_37 = arith.constant 1 : i32
      %76 = tpu.dynamic_rotate %64 by %c1_i32_37 dim 1 : vector<16x128xf32>, i32 -> vector<16x128xf32>
      %77 = vector.broadcast %75 : f32 to vector<16x128xf32>
      %78 = arith.mulf %77, %76 : vector<16x128xf32>
      %79 = arith.addf %74, %78 : vector<16x128xf32>
      %c10 = arith.constant 10 : index
      %80 = memref.load %arg2[%c10] : memref<98xf32, #tpu.memory_space<smem>>
      %81 = vector.broadcast %80 : f32 to vector<16x128xf32>
      %82 = arith.mulf %81, %64 : vector<16x128xf32>
      %83 = arith.addf %79, %82 : vector<16x128xf32>
      %c11 = arith.constant 11 : index
      %84 = memref.load %arg2[%c11] : memref<98xf32, #tpu.memory_space<smem>>
      %c127_i32_38 = arith.constant 127 : i32
      %85 = tpu.dynamic_rotate %64 by %c127_i32_38 dim 1 : vector<16x128xf32>, i32 -> vector<16x128xf32>
      %86 = vector.broadcast %84 : f32 to vector<16x128xf32>
      %87 = arith.mulf %86, %85 : vector<16x128xf32>
      %88 = arith.addf %83, %87 : vector<16x128xf32>
      %c12 = arith.constant 12 : index
      %89 = memref.load %arg2[%c12] : memref<98xf32, #tpu.memory_space<smem>>
      %c126_i32_39 = arith.constant 126 : i32
      %90 = tpu.dynamic_rotate %64 by %c126_i32_39 dim 1 : vector<16x128xf32>, i32 -> vector<16x128xf32>
      %91 = vector.broadcast %89 : f32 to vector<16x128xf32>
      %92 = arith.mulf %91, %90 : vector<16x128xf32>
      %93 = arith.addf %88, %92 : vector<16x128xf32>
      %c13 = arith.constant 13 : index
      %94 = memref.load %arg2[%c13] : memref<98xf32, #tpu.memory_space<smem>>
      %c125_i32_40 = arith.constant 125 : i32
      %95 = tpu.dynamic_rotate %64 by %c125_i32_40 dim 1 : vector<16x128xf32>, i32 -> vector<16x128xf32>
      %96 = vector.broadcast %94 : f32 to vector<16x128xf32>
      %97 = arith.mulf %96, %95 : vector<16x128xf32>
      %98 = arith.addf %93, %97 : vector<16x128xf32>
      %c0_41 = arith.constant 0 : index
      %c2_42 = arith.constant 2 : index
      %c0_43 = arith.constant 0 : index
      %99 = vector.load %arg7[%c0_41, %c2_42, %c0_43] : memref<2x24x128xf32, #tpu.memory_space<vmem>>, vector<1x16x128xf32>
      %100 = vector.shape_cast %99 : vector<1x16x128xf32> to vector<16x128xf32>
      %c14 = arith.constant 14 : index
      %101 = memref.load %arg2[%c14] : memref<98xf32, #tpu.memory_space<smem>>
      %c3_i32_44 = arith.constant 3 : i32
      %102 = tpu.dynamic_rotate %100 by %c3_i32_44 dim 1 : vector<16x128xf32>, i32 -> vector<16x128xf32>
      %103 = vector.broadcast %101 : f32 to vector<16x128xf32>
      %104 = arith.mulf %103, %102 : vector<16x128xf32>
      %105 = arith.addf %98, %104 : vector<16x128xf32>
      %c15 = arith.constant 15 : index
      %106 = memref.load %arg2[%c15] : memref<98xf32, #tpu.memory_space<smem>>
      %c2_i32_45 = arith.constant 2 : i32
      %107 = tpu.dynamic_rotate %100 by %c2_i32_45 dim 1 : vector<16x128xf32>, i32 -> vector<16x128xf32>
      %108 = vector.broadcast %106 : f32 to vector<16x128xf32>
      %109 = arith.mulf %108, %107 : vector<16x128xf32>
      %110 = arith.addf %105, %109 : vector<16x128xf32>
      %c16 = arith.constant 16 : index
      %111 = memref.load %arg2[%c16] : memref<98xf32, #tpu.memory_space<smem>>
      %c1_i32_46 = arith.constant 1 : i32
      %112 = tpu.dynamic_rotate %100 by %c1_i32_46 dim 1 : vector<16x128xf32>, i32 -> vector<16x128xf32>
      %113 = vector.broadcast %111 : f32 to vector<16x128xf32>
      %114 = arith.mulf %113, %112 : vector<16x128xf32>
      %115 = arith.addf %110, %114 : vector<16x128xf32>
      %c17 = arith.constant 17 : index
      %116 = memref.load %arg2[%c17] : memref<98xf32, #tpu.memory_space<smem>>
      %117 = vector.broadcast %116 : f32 to vector<16x128xf32>
      %118 = arith.mulf %117, %100 : vector<16x128xf32>
      %119 = arith.addf %115, %118 : vector<16x128xf32>
      %c18 = arith.constant 18 : index
      %120 = memref.load %arg2[%c18] : memref<98xf32, #tpu.memory_space<smem>>
      %c127_i32_47 = arith.constant 127 : i32
      %121 = tpu.dynamic_rotate %100 by %c127_i32_47 dim 1 : vector<16x128xf32>, i32 -> vector<16x128xf32>
      %122 = vector.broadcast %120 : f32 to vector<16x128xf32>
      %123 = arith.mulf %122, %121 : vector<16x128xf32>
      %124 = arith.addf %119, %123 : vector<16x128xf32>
      %c19 = arith.constant 19 : index
      %125 = memref.load %arg2[%c19] : memref<98xf32, #tpu.memory_space<smem>>
      %c126_i32_48 = arith.constant 126 : i32
      %126 = tpu.dynamic_rotate %100 by %c126_i32_48 dim 1 : vector<16x128xf32>, i32 -> vector<16x128xf32>
      %127 = vector.broadcast %125 : f32 to vector<16x128xf32>
      %128 = arith.mulf %127, %126 : vector<16x128xf32>
      %129 = arith.addf %124, %128 : vector<16x128xf32>
      %c20 = arith.constant 20 : index
      %130 = memref.load %arg2[%c20] : memref<98xf32, #tpu.memory_space<smem>>
      %c125_i32_49 = arith.constant 125 : i32
      %131 = tpu.dynamic_rotate %100 by %c125_i32_49 dim 1 : vector<16x128xf32>, i32 -> vector<16x128xf32>
      %132 = vector.broadcast %130 : f32 to vector<16x128xf32>
      %133 = arith.mulf %132, %131 : vector<16x128xf32>
      %134 = arith.addf %129, %133 : vector<16x128xf32>
      %c0_50 = arith.constant 0 : index
      %c3_51 = arith.constant 3 : index
      %c0_52 = arith.constant 0 : index
      %135 = vector.load %arg7[%c0_50, %c3_51, %c0_52] : memref<2x24x128xf32, #tpu.memory_space<vmem>>, vector<1x16x128xf32>
      %136 = vector.shape_cast %135 : vector<1x16x128xf32> to vector<16x128xf32>
      %c21 = arith.constant 21 : index
      %137 = memref.load %arg2[%c21] : memref<98xf32, #tpu.memory_space<smem>>
      %c3_i32_53 = arith.constant 3 : i32
      %138 = tpu.dynamic_rotate %136 by %c3_i32_53 dim 1 : vector<16x128xf32>, i32 -> vector<16x128xf32>
      %139 = vector.broadcast %137 : f32 to vector<16x128xf32>
      %140 = arith.mulf %139, %138 : vector<16x128xf32>
      %141 = arith.addf %134, %140 : vector<16x128xf32>
      %c22 = arith.constant 22 : index
      %142 = memref.load %arg2[%c22] : memref<98xf32, #tpu.memory_space<smem>>
      %c2_i32_54 = arith.constant 2 : i32
      %143 = tpu.dynamic_rotate %136 by %c2_i32_54 dim 1 : vector<16x128xf32>, i32 -> vector<16x128xf32>
      %144 = vector.broadcast %142 : f32 to vector<16x128xf32>
      %145 = arith.mulf %144, %143 : vector<16x128xf32>
      %146 = arith.addf %141, %145 : vector<16x128xf32>
      %c23 = arith.constant 23 : index
      %147 = memref.load %arg2[%c23] : memref<98xf32, #tpu.memory_space<smem>>
      %c1_i32_55 = arith.constant 1 : i32
      %148 = tpu.dynamic_rotate %136 by %c1_i32_55 dim 1 : vector<16x128xf32>, i32 -> vector<16x128xf32>
      %149 = vector.broadcast %147 : f32 to vector<16x128xf32>
      %150 = arith.mulf %149, %148 : vector<16x128xf32>
      %151 = arith.addf %146, %150 : vector<16x128xf32>
      %c24 = arith.constant 24 : index
      %152 = memref.load %arg2[%c24] : memref<98xf32, #tpu.memory_space<smem>>
      %153 = vector.broadcast %152 : f32 to vector<16x128xf32>
      %154 = arith.mulf %153, %136 : vector<16x128xf32>
      %155 = arith.addf %151, %154 : vector<16x128xf32>
      %c25 = arith.constant 25 : index
      %156 = memref.load %arg2[%c25] : memref<98xf32, #tpu.memory_space<smem>>
      %c127_i32_56 = arith.constant 127 : i32
      %157 = tpu.dynamic_rotate %136 by %c127_i32_56 dim 1 : vector<16x128xf32>, i32 -> vector<16x128xf32>
      %158 = vector.broadcast %156 : f32 to vector<16x128xf32>
      %159 = arith.mulf %158, %157 : vector<16x128xf32>
      %160 = arith.addf %155, %159 : vector<16x128xf32>
      %c26 = arith.constant 26 : index
      %161 = memref.load %arg2[%c26] : memref<98xf32, #tpu.memory_space<smem>>
      %c126_i32_57 = arith.constant 126 : i32
      %162 = tpu.dynamic_rotate %136 by %c126_i32_57 dim 1 : vector<16x128xf32>, i32 -> vector<16x128xf32>
      %163 = vector.broadcast %161 : f32 to vector<16x128xf32>
      %164 = arith.mulf %163, %162 : vector<16x128xf32>
      %165 = arith.addf %160, %164 : vector<16x128xf32>
      %c27 = arith.constant 27 : index
      %166 = memref.load %arg2[%c27] : memref<98xf32, #tpu.memory_space<smem>>
      %c125_i32_58 = arith.constant 125 : i32
      %167 = tpu.dynamic_rotate %136 by %c125_i32_58 dim 1 : vector<16x128xf32>, i32 -> vector<16x128xf32>
      %168 = vector.broadcast %166 : f32 to vector<16x128xf32>
      %169 = arith.mulf %168, %167 : vector<16x128xf32>
      %170 = arith.addf %165, %169 : vector<16x128xf32>
      %c0_59 = arith.constant 0 : index
      %c4_60 = arith.constant 4 : index
      %c0_61 = arith.constant 0 : index
      %171 = vector.load %arg7[%c0_59, %c4_60, %c0_61] : memref<2x24x128xf32, #tpu.memory_space<vmem>>, vector<1x16x128xf32>
      %172 = vector.shape_cast %171 : vector<1x16x128xf32> to vector<16x128xf32>
      %c28 = arith.constant 28 : index
      %173 = memref.load %arg2[%c28] : memref<98xf32, #tpu.memory_space<smem>>
      %c3_i32_62 = arith.constant 3 : i32
      %174 = tpu.dynamic_rotate %172 by %c3_i32_62 dim 1 : vector<16x128xf32>, i32 -> vector<16x128xf32>
      %175 = vector.broadcast %173 : f32 to vector<16x128xf32>
      %176 = arith.mulf %175, %174 : vector<16x128xf32>
      %177 = arith.addf %170, %176 : vector<16x128xf32>
      %c29 = arith.constant 29 : index
      %178 = memref.load %arg2[%c29] : memref<98xf32, #tpu.memory_space<smem>>
      %c2_i32_63 = arith.constant 2 : i32
      %179 = tpu.dynamic_rotate %172 by %c2_i32_63 dim 1 : vector<16x128xf32>, i32 -> vector<16x128xf32>
      %180 = vector.broadcast %178 : f32 to vector<16x128xf32>
      %181 = arith.mulf %180, %179 : vector<16x128xf32>
      %182 = arith.addf %177, %181 : vector<16x128xf32>
      %c30 = arith.constant 30 : index
      %183 = memref.load %arg2[%c30] : memref<98xf32, #tpu.memory_space<smem>>
      %c1_i32_64 = arith.constant 1 : i32
      %184 = tpu.dynamic_rotate %172 by %c1_i32_64 dim 1 : vector<16x128xf32>, i32 -> vector<16x128xf32>
      %185 = vector.broadcast %183 : f32 to vector<16x128xf32>
      %186 = arith.mulf %185, %184 : vector<16x128xf32>
      %187 = arith.addf %182, %186 : vector<16x128xf32>
      %c31 = arith.constant 31 : index
      %188 = memref.load %arg2[%c31] : memref<98xf32, #tpu.memory_space<smem>>
      %189 = vector.broadcast %188 : f32 to vector<16x128xf32>
      %190 = arith.mulf %189, %172 : vector<16x128xf32>
      %191 = arith.addf %187, %190 : vector<16x128xf32>
      %c32 = arith.constant 32 : index
      %192 = memref.load %arg2[%c32] : memref<98xf32, #tpu.memory_space<smem>>
      %c127_i32_65 = arith.constant 127 : i32
      %193 = tpu.dynamic_rotate %172 by %c127_i32_65 dim 1 : vector<16x128xf32>, i32 -> vector<16x128xf32>
      %194 = vector.broadcast %192 : f32 to vector<16x128xf32>
      %195 = arith.mulf %194, %193 : vector<16x128xf32>
      %196 = arith.addf %191, %195 : vector<16x128xf32>
      %c33 = arith.constant 33 : index
      %197 = memref.load %arg2[%c33] : memref<98xf32, #tpu.memory_space<smem>>
      %c126_i32_66 = arith.constant 126 : i32
      %198 = tpu.dynamic_rotate %172 by %c126_i32_66 dim 1 : vector<16x128xf32>, i32 -> vector<16x128xf32>
      %199 = vector.broadcast %197 : f32 to vector<16x128xf32>
      %200 = arith.mulf %199, %198 : vector<16x128xf32>
      %201 = arith.addf %196, %200 : vector<16x128xf32>
      %c34 = arith.constant 34 : index
      %202 = memref.load %arg2[%c34] : memref<98xf32, #tpu.memory_space<smem>>
      %c125_i32_67 = arith.constant 125 : i32
      %203 = tpu.dynamic_rotate %172 by %c125_i32_67 dim 1 : vector<16x128xf32>, i32 -> vector<16x128xf32>
      %204 = vector.broadcast %202 : f32 to vector<16x128xf32>
      %205 = arith.mulf %204, %203 : vector<16x128xf32>
      %206 = arith.addf %201, %205 : vector<16x128xf32>
      %c0_68 = arith.constant 0 : index
      %c5_69 = arith.constant 5 : index
      %c0_70 = arith.constant 0 : index
      %207 = vector.load %arg7[%c0_68, %c5_69, %c0_70] : memref<2x24x128xf32, #tpu.memory_space<vmem>>, vector<1x16x128xf32>
      %208 = vector.shape_cast %207 : vector<1x16x128xf32> to vector<16x128xf32>
      %c35 = arith.constant 35 : index
      %209 = memref.load %arg2[%c35] : memref<98xf32, #tpu.memory_space<smem>>
      %c3_i32_71 = arith.constant 3 : i32
      %210 = tpu.dynamic_rotate %208 by %c3_i32_71 dim 1 : vector<16x128xf32>, i32 -> vector<16x128xf32>
      %211 = vector.broadcast %209 : f32 to vector<16x128xf32>
      %212 = arith.mulf %211, %210 : vector<16x128xf32>
      %213 = arith.addf %206, %212 : vector<16x128xf32>
      %c36 = arith.constant 36 : index
      %214 = memref.load %arg2[%c36] : memref<98xf32, #tpu.memory_space<smem>>
      %c2_i32_72 = arith.constant 2 : i32
      %215 = tpu.dynamic_rotate %208 by %c2_i32_72 dim 1 : vector<16x128xf32>, i32 -> vector<16x128xf32>
      %216 = vector.broadcast %214 : f32 to vector<16x128xf32>
      %217 = arith.mulf %216, %215 : vector<16x128xf32>
      %218 = arith.addf %213, %217 : vector<16x128xf32>
      %c37 = arith.constant 37 : index
      %219 = memref.load %arg2[%c37] : memref<98xf32, #tpu.memory_space<smem>>
      %c1_i32_73 = arith.constant 1 : i32
      %220 = tpu.dynamic_rotate %208 by %c1_i32_73 dim 1 : vector<16x128xf32>, i32 -> vector<16x128xf32>
      %221 = vector.broadcast %219 : f32 to vector<16x128xf32>
      %222 = arith.mulf %221, %220 : vector<16x128xf32>
      %223 = arith.addf %218, %222 : vector<16x128xf32>
      %c38 = arith.constant 38 : index
      %224 = memref.load %arg2[%c38] : memref<98xf32, #tpu.memory_space<smem>>
      %225 = vector.broadcast %224 : f32 to vector<16x128xf32>
      %226 = arith.mulf %225, %208 : vector<16x128xf32>
      %227 = arith.addf %223, %226 : vector<16x128xf32>
      %c39 = arith.constant 39 : index
      %228 = memref.load %arg2[%c39] : memref<98xf32, #tpu.memory_space<smem>>
      %c127_i32_74 = arith.constant 127 : i32
      %229 = tpu.dynamic_rotate %208 by %c127_i32_74 dim 1 : vector<16x128xf32>, i32 -> vector<16x128xf32>
      %230 = vector.broadcast %228 : f32 to vector<16x128xf32>
      %231 = arith.mulf %230, %229 : vector<16x128xf32>
      %232 = arith.addf %227, %231 : vector<16x128xf32>
      %c40 = arith.constant 40 : index
      %233 = memref.load %arg2[%c40] : memref<98xf32, #tpu.memory_space<smem>>
      %c126_i32_75 = arith.constant 126 : i32
      %234 = tpu.dynamic_rotate %208 by %c126_i32_75 dim 1 : vector<16x128xf32>, i32 -> vector<16x128xf32>
      %235 = vector.broadcast %233 : f32 to vector<16x128xf32>
      %236 = arith.mulf %235, %234 : vector<16x128xf32>
      %237 = arith.addf %232, %236 : vector<16x128xf32>
      %c41 = arith.constant 41 : index
      %238 = memref.load %arg2[%c41] : memref<98xf32, #tpu.memory_space<smem>>
      %c125_i32_76 = arith.constant 125 : i32
      %239 = tpu.dynamic_rotate %208 by %c125_i32_76 dim 1 : vector<16x128xf32>, i32 -> vector<16x128xf32>
      %240 = vector.broadcast %238 : f32 to vector<16x128xf32>
      %241 = arith.mulf %240, %239 : vector<16x128xf32>
      %242 = arith.addf %237, %241 : vector<16x128xf32>
      %c0_77 = arith.constant 0 : index
      %c6_78 = arith.constant 6 : index
      %c0_79 = arith.constant 0 : index
      %243 = vector.load %arg7[%c0_77, %c6_78, %c0_79] : memref<2x24x128xf32, #tpu.memory_space<vmem>>, vector<1x16x128xf32>
      %244 = vector.shape_cast %243 : vector<1x16x128xf32> to vector<16x128xf32>
      %c42 = arith.constant 42 : index
      %245 = memref.load %arg2[%c42] : memref<98xf32, #tpu.memory_space<smem>>
      %c3_i32_80 = arith.constant 3 : i32
      %246 = tpu.dynamic_rotate %244 by %c3_i32_80 dim 1 : vector<16x128xf32>, i32 -> vector<16x128xf32>
      %247 = vector.broadcast %245 : f32 to vector<16x128xf32>
      %248 = arith.mulf %247, %246 : vector<16x128xf32>
      %249 = arith.addf %242, %248 : vector<16x128xf32>
      %c43 = arith.constant 43 : index
      %250 = memref.load %arg2[%c43] : memref<98xf32, #tpu.memory_space<smem>>
      %c2_i32_81 = arith.constant 2 : i32
      %251 = tpu.dynamic_rotate %244 by %c2_i32_81 dim 1 : vector<16x128xf32>, i32 -> vector<16x128xf32>
      %252 = vector.broadcast %250 : f32 to vector<16x128xf32>
      %253 = arith.mulf %252, %251 : vector<16x128xf32>
      %254 = arith.addf %249, %253 : vector<16x128xf32>
      %c44 = arith.constant 44 : index
      %255 = memref.load %arg2[%c44] : memref<98xf32, #tpu.memory_space<smem>>
      %c1_i32_82 = arith.constant 1 : i32
      %256 = tpu.dynamic_rotate %244 by %c1_i32_82 dim 1 : vector<16x128xf32>, i32 -> vector<16x128xf32>
      %257 = vector.broadcast %255 : f32 to vector<16x128xf32>
      %258 = arith.mulf %257, %256 : vector<16x128xf32>
      %259 = arith.addf %254, %258 : vector<16x128xf32>
      %c45 = arith.constant 45 : index
      %260 = memref.load %arg2[%c45] : memref<98xf32, #tpu.memory_space<smem>>
      %261 = vector.broadcast %260 : f32 to vector<16x128xf32>
      %262 = arith.mulf %261, %244 : vector<16x128xf32>
      %263 = arith.addf %259, %262 : vector<16x128xf32>
      %c46 = arith.constant 46 : index
      %264 = memref.load %arg2[%c46] : memref<98xf32, #tpu.memory_space<smem>>
      %c127_i32_83 = arith.constant 127 : i32
      %265 = tpu.dynamic_rotate %244 by %c127_i32_83 dim 1 : vector<16x128xf32>, i32 -> vector<16x128xf32>
      %266 = vector.broadcast %264 : f32 to vector<16x128xf32>
      %267 = arith.mulf %266, %265 : vector<16x128xf32>
      %268 = arith.addf %263, %267 : vector<16x128xf32>
      %c47 = arith.constant 47 : index
      %269 = memref.load %arg2[%c47] : memref<98xf32, #tpu.memory_space<smem>>
      %c126_i32_84 = arith.constant 126 : i32
      %270 = tpu.dynamic_rotate %244 by %c126_i32_84 dim 1 : vector<16x128xf32>, i32 -> vector<16x128xf32>
      %271 = vector.broadcast %269 : f32 to vector<16x128xf32>
      %272 = arith.mulf %271, %270 : vector<16x128xf32>
      %273 = arith.addf %268, %272 : vector<16x128xf32>
      %c48 = arith.constant 48 : index
      %274 = memref.load %arg2[%c48] : memref<98xf32, #tpu.memory_space<smem>>
      %c125_i32_85 = arith.constant 125 : i32
      %275 = tpu.dynamic_rotate %244 by %c125_i32_85 dim 1 : vector<16x128xf32>, i32 -> vector<16x128xf32>
      %276 = vector.broadcast %274 : f32 to vector<16x128xf32>
      %277 = arith.mulf %276, %275 : vector<16x128xf32>
      %278 = arith.addf %273, %277 : vector<16x128xf32>
      %cst_86 = arith.constant 0.000000e+00 : f32
      %279 = vector.broadcast %cst_86 : f32 to vector<16x128xf32>
      %c1_87 = arith.constant 1 : index
      %c0_88 = arith.constant 0 : index
      %c0_89 = arith.constant 0 : index
      %280 = vector.load %arg7[%c1_87, %c0_88, %c0_89] : memref<2x24x128xf32, #tpu.memory_space<vmem>>, vector<1x16x128xf32>
      %281 = vector.shape_cast %280 : vector<1x16x128xf32> to vector<16x128xf32>
      %c49 = arith.constant 49 : index
      %282 = memref.load %arg2[%c49] : memref<98xf32, #tpu.memory_space<smem>>
      %c3_i32_90 = arith.constant 3 : i32
      %283 = tpu.dynamic_rotate %281 by %c3_i32_90 dim 1 : vector<16x128xf32>, i32 -> vector<16x128xf32>
      %284 = vector.broadcast %282 : f32 to vector<16x128xf32>
      %285 = arith.mulf %284, %283 : vector<16x128xf32>
      %286 = arith.addf %279, %285 : vector<16x128xf32>
      %c50 = arith.constant 50 : index
      %287 = memref.load %arg2[%c50] : memref<98xf32, #tpu.memory_space<smem>>
      %c2_i32_91 = arith.constant 2 : i32
      %288 = tpu.dynamic_rotate %281 by %c2_i32_91 dim 1 : vector<16x128xf32>, i32 -> vector<16x128xf32>
      %289 = vector.broadcast %287 : f32 to vector<16x128xf32>
      %290 = arith.mulf %289, %288 : vector<16x128xf32>
      %291 = arith.addf %286, %290 : vector<16x128xf32>
      %c51 = arith.constant 51 : index
      %292 = memref.load %arg2[%c51] : memref<98xf32, #tpu.memory_space<smem>>
      %c1_i32_92 = arith.constant 1 : i32
      %293 = tpu.dynamic_rotate %281 by %c1_i32_92 dim 1 : vector<16x128xf32>, i32 -> vector<16x128xf32>
      %294 = vector.broadcast %292 : f32 to vector<16x128xf32>
      %295 = arith.mulf %294, %293 : vector<16x128xf32>
      %296 = arith.addf %291, %295 : vector<16x128xf32>
      %c52 = arith.constant 52 : index
      %297 = memref.load %arg2[%c52] : memref<98xf32, #tpu.memory_space<smem>>
      %298 = vector.broadcast %297 : f32 to vector<16x128xf32>
      %299 = arith.mulf %298, %281 : vector<16x128xf32>
      %300 = arith.addf %296, %299 : vector<16x128xf32>
      %c53 = arith.constant 53 : index
      %301 = memref.load %arg2[%c53] : memref<98xf32, #tpu.memory_space<smem>>
      %c127_i32_93 = arith.constant 127 : i32
      %302 = tpu.dynamic_rotate %281 by %c127_i32_93 dim 1 : vector<16x128xf32>, i32 -> vector<16x128xf32>
      %303 = vector.broadcast %301 : f32 to vector<16x128xf32>
      %304 = arith.mulf %303, %302 : vector<16x128xf32>
      %305 = arith.addf %300, %304 : vector<16x128xf32>
      %c54 = arith.constant 54 : index
      %306 = memref.load %arg2[%c54] : memref<98xf32, #tpu.memory_space<smem>>
      %c126_i32_94 = arith.constant 126 : i32
      %307 = tpu.dynamic_rotate %281 by %c126_i32_94 dim 1 : vector<16x128xf32>, i32 -> vector<16x128xf32>
      %308 = vector.broadcast %306 : f32 to vector<16x128xf32>
      %309 = arith.mulf %308, %307 : vector<16x128xf32>
      %310 = arith.addf %305, %309 : vector<16x128xf32>
      %c55 = arith.constant 55 : index
      %311 = memref.load %arg2[%c55] : memref<98xf32, #tpu.memory_space<smem>>
      %c125_i32_95 = arith.constant 125 : i32
      %312 = tpu.dynamic_rotate %281 by %c125_i32_95 dim 1 : vector<16x128xf32>, i32 -> vector<16x128xf32>
      %313 = vector.broadcast %311 : f32 to vector<16x128xf32>
      %314 = arith.mulf %313, %312 : vector<16x128xf32>
      %315 = arith.addf %310, %314 : vector<16x128xf32>
      %c1_96 = arith.constant 1 : index
      %c1_97 = arith.constant 1 : index
      %c0_98 = arith.constant 0 : index
      %316 = vector.load %arg7[%c1_96, %c1_97, %c0_98] : memref<2x24x128xf32, #tpu.memory_space<vmem>>, vector<1x16x128xf32>
      %317 = vector.shape_cast %316 : vector<1x16x128xf32> to vector<16x128xf32>
      %c56 = arith.constant 56 : index
      %318 = memref.load %arg2[%c56] : memref<98xf32, #tpu.memory_space<smem>>
      %c3_i32_99 = arith.constant 3 : i32
      %319 = tpu.dynamic_rotate %317 by %c3_i32_99 dim 1 : vector<16x128xf32>, i32 -> vector<16x128xf32>
      %320 = vector.broadcast %318 : f32 to vector<16x128xf32>
      %321 = arith.mulf %320, %319 : vector<16x128xf32>
      %322 = arith.addf %315, %321 : vector<16x128xf32>
      %c57 = arith.constant 57 : index
      %323 = memref.load %arg2[%c57] : memref<98xf32, #tpu.memory_space<smem>>
      %c2_i32_100 = arith.constant 2 : i32
      %324 = tpu.dynamic_rotate %317 by %c2_i32_100 dim 1 : vector<16x128xf32>, i32 -> vector<16x128xf32>
      %325 = vector.broadcast %323 : f32 to vector<16x128xf32>
      %326 = arith.mulf %325, %324 : vector<16x128xf32>
      %327 = arith.addf %322, %326 : vector<16x128xf32>
      %c58 = arith.constant 58 : index
      %328 = memref.load %arg2[%c58] : memref<98xf32, #tpu.memory_space<smem>>
      %c1_i32_101 = arith.constant 1 : i32
      %329 = tpu.dynamic_rotate %317 by %c1_i32_101 dim 1 : vector<16x128xf32>, i32 -> vector<16x128xf32>
      %330 = vector.broadcast %328 : f32 to vector<16x128xf32>
      %331 = arith.mulf %330, %329 : vector<16x128xf32>
      %332 = arith.addf %327, %331 : vector<16x128xf32>
      %c59 = arith.constant 59 : index
      %333 = memref.load %arg2[%c59] : memref<98xf32, #tpu.memory_space<smem>>
      %334 = vector.broadcast %333 : f32 to vector<16x128xf32>
      %335 = arith.mulf %334, %317 : vector<16x128xf32>
      %336 = arith.addf %332, %335 : vector<16x128xf32>
      %c60 = arith.constant 60 : index
      %337 = memref.load %arg2[%c60] : memref<98xf32, #tpu.memory_space<smem>>
      %c127_i32_102 = arith.constant 127 : i32
      %338 = tpu.dynamic_rotate %317 by %c127_i32_102 dim 1 : vector<16x128xf32>, i32 -> vector<16x128xf32>
      %339 = vector.broadcast %337 : f32 to vector<16x128xf32>
      %340 = arith.mulf %339, %338 : vector<16x128xf32>
      %341 = arith.addf %336, %340 : vector<16x128xf32>
      %c61 = arith.constant 61 : index
      %342 = memref.load %arg2[%c61] : memref<98xf32, #tpu.memory_space<smem>>
      %c126_i32_103 = arith.constant 126 : i32
      %343 = tpu.dynamic_rotate %317 by %c126_i32_103 dim 1 : vector<16x128xf32>, i32 -> vector<16x128xf32>
      %344 = vector.broadcast %342 : f32 to vector<16x128xf32>
      %345 = arith.mulf %344, %343 : vector<16x128xf32>
      %346 = arith.addf %341, %345 : vector<16x128xf32>
      %c62 = arith.constant 62 : index
      %347 = memref.load %arg2[%c62] : memref<98xf32, #tpu.memory_space<smem>>
      %c125_i32_104 = arith.constant 125 : i32
      %348 = tpu.dynamic_rotate %317 by %c125_i32_104 dim 1 : vector<16x128xf32>, i32 -> vector<16x128xf32>
      %349 = vector.broadcast %347 : f32 to vector<16x128xf32>
      %350 = arith.mulf %349, %348 : vector<16x128xf32>
      %351 = arith.addf %346, %350 : vector<16x128xf32>
      %c1_105 = arith.constant 1 : index
      %c2_106 = arith.constant 2 : index
      %c0_107 = arith.constant 0 : index
      %352 = vector.load %arg7[%c1_105, %c2_106, %c0_107] : memref<2x24x128xf32, #tpu.memory_space<vmem>>, vector<1x16x128xf32>
      %353 = vector.shape_cast %352 : vector<1x16x128xf32> to vector<16x128xf32>
      %c63 = arith.constant 63 : index
      %354 = memref.load %arg2[%c63] : memref<98xf32, #tpu.memory_space<smem>>
      %c3_i32_108 = arith.constant 3 : i32
      %355 = tpu.dynamic_rotate %353 by %c3_i32_108 dim 1 : vector<16x128xf32>, i32 -> vector<16x128xf32>
      %356 = vector.broadcast %354 : f32 to vector<16x128xf32>
      %357 = arith.mulf %356, %355 : vector<16x128xf32>
      %358 = arith.addf %351, %357 : vector<16x128xf32>
      %c64 = arith.constant 64 : index
      %359 = memref.load %arg2[%c64] : memref<98xf32, #tpu.memory_space<smem>>
      %c2_i32_109 = arith.constant 2 : i32
      %360 = tpu.dynamic_rotate %353 by %c2_i32_109 dim 1 : vector<16x128xf32>, i32 -> vector<16x128xf32>
      %361 = vector.broadcast %359 : f32 to vector<16x128xf32>
      %362 = arith.mulf %361, %360 : vector<16x128xf32>
      %363 = arith.addf %358, %362 : vector<16x128xf32>
      %c65 = arith.constant 65 : index
      %364 = memref.load %arg2[%c65] : memref<98xf32, #tpu.memory_space<smem>>
      %c1_i32_110 = arith.constant 1 : i32
      %365 = tpu.dynamic_rotate %353 by %c1_i32_110 dim 1 : vector<16x128xf32>, i32 -> vector<16x128xf32>
      %366 = vector.broadcast %364 : f32 to vector<16x128xf32>
      %367 = arith.mulf %366, %365 : vector<16x128xf32>
      %368 = arith.addf %363, %367 : vector<16x128xf32>
      %c66 = arith.constant 66 : index
      %369 = memref.load %arg2[%c66] : memref<98xf32, #tpu.memory_space<smem>>
      %370 = vector.broadcast %369 : f32 to vector<16x128xf32>
      %371 = arith.mulf %370, %353 : vector<16x128xf32>
      %372 = arith.addf %368, %371 : vector<16x128xf32>
      %c67 = arith.constant 67 : index
      %373 = memref.load %arg2[%c67] : memref<98xf32, #tpu.memory_space<smem>>
      %c127_i32_111 = arith.constant 127 : i32
      %374 = tpu.dynamic_rotate %353 by %c127_i32_111 dim 1 : vector<16x128xf32>, i32 -> vector<16x128xf32>
      %375 = vector.broadcast %373 : f32 to vector<16x128xf32>
      %376 = arith.mulf %375, %374 : vector<16x128xf32>
      %377 = arith.addf %372, %376 : vector<16x128xf32>
      %c68 = arith.constant 68 : index
      %378 = memref.load %arg2[%c68] : memref<98xf32, #tpu.memory_space<smem>>
      %c126_i32_112 = arith.constant 126 : i32
      %379 = tpu.dynamic_rotate %353 by %c126_i32_112 dim 1 : vector<16x128xf32>, i32 -> vector<16x128xf32>
      %380 = vector.broadcast %378 : f32 to vector<16x128xf32>
      %381 = arith.mulf %380, %379 : vector<16x128xf32>
      %382 = arith.addf %377, %381 : vector<16x128xf32>
      %c69 = arith.constant 69 : index
      %383 = memref.load %arg2[%c69] : memref<98xf32, #tpu.memory_space<smem>>
      %c125_i32_113 = arith.constant 125 : i32
      %384 = tpu.dynamic_rotate %353 by %c125_i32_113 dim 1 : vector<16x128xf32>, i32 -> vector<16x128xf32>
      %385 = vector.broadcast %383 : f32 to vector<16x128xf32>
      %386 = arith.mulf %385, %384 : vector<16x128xf32>
      %387 = arith.addf %382, %386 : vector<16x128xf32>
      %c1_114 = arith.constant 1 : index
      %c3_115 = arith.constant 3 : index
      %c0_116 = arith.constant 0 : index
      %388 = vector.load %arg7[%c1_114, %c3_115, %c0_116] : memref<2x24x128xf32, #tpu.memory_space<vmem>>, vector<1x16x128xf32>
      %389 = vector.shape_cast %388 : vector<1x16x128xf32> to vector<16x128xf32>
      %c70 = arith.constant 70 : index
      %390 = memref.load %arg2[%c70] : memref<98xf32, #tpu.memory_space<smem>>
      %c3_i32_117 = arith.constant 3 : i32
      %391 = tpu.dynamic_rotate %389 by %c3_i32_117 dim 1 : vector<16x128xf32>, i32 -> vector<16x128xf32>
      %392 = vector.broadcast %390 : f32 to vector<16x128xf32>
      %393 = arith.mulf %392, %391 : vector<16x128xf32>
      %394 = arith.addf %387, %393 : vector<16x128xf32>
      %c71 = arith.constant 71 : index
      %395 = memref.load %arg2[%c71] : memref<98xf32, #tpu.memory_space<smem>>
      %c2_i32_118 = arith.constant 2 : i32
      %396 = tpu.dynamic_rotate %389 by %c2_i32_118 dim 1 : vector<16x128xf32>, i32 -> vector<16x128xf32>
      %397 = vector.broadcast %395 : f32 to vector<16x128xf32>
      %398 = arith.mulf %397, %396 : vector<16x128xf32>
      %399 = arith.addf %394, %398 : vector<16x128xf32>
      %c72 = arith.constant 72 : index
      %400 = memref.load %arg2[%c72] : memref<98xf32, #tpu.memory_space<smem>>
      %c1_i32_119 = arith.constant 1 : i32
      %401 = tpu.dynamic_rotate %389 by %c1_i32_119 dim 1 : vector<16x128xf32>, i32 -> vector<16x128xf32>
      %402 = vector.broadcast %400 : f32 to vector<16x128xf32>
      %403 = arith.mulf %402, %401 : vector<16x128xf32>
      %404 = arith.addf %399, %403 : vector<16x128xf32>
      %c73 = arith.constant 73 : index
      %405 = memref.load %arg2[%c73] : memref<98xf32, #tpu.memory_space<smem>>
      %406 = vector.broadcast %405 : f32 to vector<16x128xf32>
      %407 = arith.mulf %406, %389 : vector<16x128xf32>
      %408 = arith.addf %404, %407 : vector<16x128xf32>
      %c74 = arith.constant 74 : index
      %409 = memref.load %arg2[%c74] : memref<98xf32, #tpu.memory_space<smem>>
      %c127_i32_120 = arith.constant 127 : i32
      %410 = tpu.dynamic_rotate %389 by %c127_i32_120 dim 1 : vector<16x128xf32>, i32 -> vector<16x128xf32>
      %411 = vector.broadcast %409 : f32 to vector<16x128xf32>
      %412 = arith.mulf %411, %410 : vector<16x128xf32>
      %413 = arith.addf %408, %412 : vector<16x128xf32>
      %c75 = arith.constant 75 : index
      %414 = memref.load %arg2[%c75] : memref<98xf32, #tpu.memory_space<smem>>
      %c126_i32_121 = arith.constant 126 : i32
      %415 = tpu.dynamic_rotate %389 by %c126_i32_121 dim 1 : vector<16x128xf32>, i32 -> vector<16x128xf32>
      %416 = vector.broadcast %414 : f32 to vector<16x128xf32>
      %417 = arith.mulf %416, %415 : vector<16x128xf32>
      %418 = arith.addf %413, %417 : vector<16x128xf32>
      %c76 = arith.constant 76 : index
      %419 = memref.load %arg2[%c76] : memref<98xf32, #tpu.memory_space<smem>>
      %c125_i32_122 = arith.constant 125 : i32
      %420 = tpu.dynamic_rotate %389 by %c125_i32_122 dim 1 : vector<16x128xf32>, i32 -> vector<16x128xf32>
      %421 = vector.broadcast %419 : f32 to vector<16x128xf32>
      %422 = arith.mulf %421, %420 : vector<16x128xf32>
      %423 = arith.addf %418, %422 : vector<16x128xf32>
      %c1_123 = arith.constant 1 : index
      %c4_124 = arith.constant 4 : index
      %c0_125 = arith.constant 0 : index
      %424 = vector.load %arg7[%c1_123, %c4_124, %c0_125] : memref<2x24x128xf32, #tpu.memory_space<vmem>>, vector<1x16x128xf32>
      %425 = vector.shape_cast %424 : vector<1x16x128xf32> to vector<16x128xf32>
      %c77 = arith.constant 77 : index
      %426 = memref.load %arg2[%c77] : memref<98xf32, #tpu.memory_space<smem>>
      %c3_i32_126 = arith.constant 3 : i32
      %427 = tpu.dynamic_rotate %425 by %c3_i32_126 dim 1 : vector<16x128xf32>, i32 -> vector<16x128xf32>
      %428 = vector.broadcast %426 : f32 to vector<16x128xf32>
      %429 = arith.mulf %428, %427 : vector<16x128xf32>
      %430 = arith.addf %423, %429 : vector<16x128xf32>
      %c78 = arith.constant 78 : index
      %431 = memref.load %arg2[%c78] : memref<98xf32, #tpu.memory_space<smem>>
      %c2_i32_127 = arith.constant 2 : i32
      %432 = tpu.dynamic_rotate %425 by %c2_i32_127 dim 1 : vector<16x128xf32>, i32 -> vector<16x128xf32>
      %433 = vector.broadcast %431 : f32 to vector<16x128xf32>
      %434 = arith.mulf %433, %432 : vector<16x128xf32>
      %435 = arith.addf %430, %434 : vector<16x128xf32>
      %c79 = arith.constant 79 : index
      %436 = memref.load %arg2[%c79] : memref<98xf32, #tpu.memory_space<smem>>
      %c1_i32_128 = arith.constant 1 : i32
      %437 = tpu.dynamic_rotate %425 by %c1_i32_128 dim 1 : vector<16x128xf32>, i32 -> vector<16x128xf32>
      %438 = vector.broadcast %436 : f32 to vector<16x128xf32>
      %439 = arith.mulf %438, %437 : vector<16x128xf32>
      %440 = arith.addf %435, %439 : vector<16x128xf32>
      %c80 = arith.constant 80 : index
      %441 = memref.load %arg2[%c80] : memref<98xf32, #tpu.memory_space<smem>>
      %442 = vector.broadcast %441 : f32 to vector<16x128xf32>
      %443 = arith.mulf %442, %425 : vector<16x128xf32>
      %444 = arith.addf %440, %443 : vector<16x128xf32>
      %c81 = arith.constant 81 : index
      %445 = memref.load %arg2[%c81] : memref<98xf32, #tpu.memory_space<smem>>
      %c127_i32_129 = arith.constant 127 : i32
      %446 = tpu.dynamic_rotate %425 by %c127_i32_129 dim 1 : vector<16x128xf32>, i32 -> vector<16x128xf32>
      %447 = vector.broadcast %445 : f32 to vector<16x128xf32>
      %448 = arith.mulf %447, %446 : vector<16x128xf32>
      %449 = arith.addf %444, %448 : vector<16x128xf32>
      %c82 = arith.constant 82 : index
      %450 = memref.load %arg2[%c82] : memref<98xf32, #tpu.memory_space<smem>>
      %c126_i32_130 = arith.constant 126 : i32
      %451 = tpu.dynamic_rotate %425 by %c126_i32_130 dim 1 : vector<16x128xf32>, i32 -> vector<16x128xf32>
      %452 = vector.broadcast %450 : f32 to vector<16x128xf32>
      %453 = arith.mulf %452, %451 : vector<16x128xf32>
      %454 = arith.addf %449, %453 : vector<16x128xf32>
      %c83 = arith.constant 83 : index
      %455 = memref.load %arg2[%c83] : memref<98xf32, #tpu.memory_space<smem>>
      %c125_i32_131 = arith.constant 125 : i32
      %456 = tpu.dynamic_rotate %425 by %c125_i32_131 dim 1 : vector<16x128xf32>, i32 -> vector<16x128xf32>
      %457 = vector.broadcast %455 : f32 to vector<16x128xf32>
      %458 = arith.mulf %457, %456 : vector<16x128xf32>
      %459 = arith.addf %454, %458 : vector<16x128xf32>
      %c1_132 = arith.constant 1 : index
      %c5_133 = arith.constant 5 : index
      %c0_134 = arith.constant 0 : index
      %460 = vector.load %arg7[%c1_132, %c5_133, %c0_134] : memref<2x24x128xf32, #tpu.memory_space<vmem>>, vector<1x16x128xf32>
      %461 = vector.shape_cast %460 : vector<1x16x128xf32> to vector<16x128xf32>
      %c84 = arith.constant 84 : index
      %462 = memref.load %arg2[%c84] : memref<98xf32, #tpu.memory_space<smem>>
      %c3_i32_135 = arith.constant 3 : i32
      %463 = tpu.dynamic_rotate %461 by %c3_i32_135 dim 1 : vector<16x128xf32>, i32 -> vector<16x128xf32>
      %464 = vector.broadcast %462 : f32 to vector<16x128xf32>
      %465 = arith.mulf %464, %463 : vector<16x128xf32>
      %466 = arith.addf %459, %465 : vector<16x128xf32>
      %c85 = arith.constant 85 : index
      %467 = memref.load %arg2[%c85] : memref<98xf32, #tpu.memory_space<smem>>
      %c2_i32_136 = arith.constant 2 : i32
      %468 = tpu.dynamic_rotate %461 by %c2_i32_136 dim 1 : vector<16x128xf32>, i32 -> vector<16x128xf32>
      %469 = vector.broadcast %467 : f32 to vector<16x128xf32>
      %470 = arith.mulf %469, %468 : vector<16x128xf32>
      %471 = arith.addf %466, %470 : vector<16x128xf32>
      %c86 = arith.constant 86 : index
      %472 = memref.load %arg2[%c86] : memref<98xf32, #tpu.memory_space<smem>>
      %c1_i32_137 = arith.constant 1 : i32
      %473 = tpu.dynamic_rotate %461 by %c1_i32_137 dim 1 : vector<16x128xf32>, i32 -> vector<16x128xf32>
      %474 = vector.broadcast %472 : f32 to vector<16x128xf32>
      %475 = arith.mulf %474, %473 : vector<16x128xf32>
      %476 = arith.addf %471, %475 : vector<16x128xf32>
      %c87 = arith.constant 87 : index
      %477 = memref.load %arg2[%c87] : memref<98xf32, #tpu.memory_space<smem>>
      %478 = vector.broadcast %477 : f32 to vector<16x128xf32>
      %479 = arith.mulf %478, %461 : vector<16x128xf32>
      %480 = arith.addf %476, %479 : vector<16x128xf32>
      %c88 = arith.constant 88 : index
      %481 = memref.load %arg2[%c88] : memref<98xf32, #tpu.memory_space<smem>>
      %c127_i32_138 = arith.constant 127 : i32
      %482 = tpu.dynamic_rotate %461 by %c127_i32_138 dim 1 : vector<16x128xf32>, i32 -> vector<16x128xf32>
      %483 = vector.broadcast %481 : f32 to vector<16x128xf32>
      %484 = arith.mulf %483, %482 : vector<16x128xf32>
      %485 = arith.addf %480, %484 : vector<16x128xf32>
      %c89 = arith.constant 89 : index
      %486 = memref.load %arg2[%c89] : memref<98xf32, #tpu.memory_space<smem>>
      %c126_i32_139 = arith.constant 126 : i32
      %487 = tpu.dynamic_rotate %461 by %c126_i32_139 dim 1 : vector<16x128xf32>, i32 -> vector<16x128xf32>
      %488 = vector.broadcast %486 : f32 to vector<16x128xf32>
      %489 = arith.mulf %488, %487 : vector<16x128xf32>
      %490 = arith.addf %485, %489 : vector<16x128xf32>
      %c90 = arith.constant 90 : index
      %491 = memref.load %arg2[%c90] : memref<98xf32, #tpu.memory_space<smem>>
      %c125_i32_140 = arith.constant 125 : i32
      %492 = tpu.dynamic_rotate %461 by %c125_i32_140 dim 1 : vector<16x128xf32>, i32 -> vector<16x128xf32>
      %493 = vector.broadcast %491 : f32 to vector<16x128xf32>
      %494 = arith.mulf %493, %492 : vector<16x128xf32>
      %495 = arith.addf %490, %494 : vector<16x128xf32>
      %c1_141 = arith.constant 1 : index
      %c6_142 = arith.constant 6 : index
      %c0_143 = arith.constant 0 : index
      %496 = vector.load %arg7[%c1_141, %c6_142, %c0_143] : memref<2x24x128xf32, #tpu.memory_space<vmem>>, vector<1x16x128xf32>
      %497 = vector.shape_cast %496 : vector<1x16x128xf32> to vector<16x128xf32>
      %c91 = arith.constant 91 : index
      %498 = memref.load %arg2[%c91] : memref<98xf32, #tpu.memory_space<smem>>
      %c3_i32_144 = arith.constant 3 : i32
      %499 = tpu.dynamic_rotate %497 by %c3_i32_144 dim 1 : vector<16x128xf32>, i32 -> vector<16x128xf32>
      %500 = vector.broadcast %498 : f32 to vector<16x128xf32>
      %501 = arith.mulf %500, %499 : vector<16x128xf32>
      %502 = arith.addf %495, %501 : vector<16x128xf32>
      %c92 = arith.constant 92 : index
      %503 = memref.load %arg2[%c92] : memref<98xf32, #tpu.memory_space<smem>>
      %c2_i32_145 = arith.constant 2 : i32
      %504 = tpu.dynamic_rotate %497 by %c2_i32_145 dim 1 : vector<16x128xf32>, i32 -> vector<16x128xf32>
      %505 = vector.broadcast %503 : f32 to vector<16x128xf32>
      %506 = arith.mulf %505, %504 : vector<16x128xf32>
      %507 = arith.addf %502, %506 : vector<16x128xf32>
      %c93 = arith.constant 93 : index
      %508 = memref.load %arg2[%c93] : memref<98xf32, #tpu.memory_space<smem>>
      %c1_i32_146 = arith.constant 1 : i32
      %509 = tpu.dynamic_rotate %497 by %c1_i32_146 dim 1 : vector<16x128xf32>, i32 -> vector<16x128xf32>
      %510 = vector.broadcast %508 : f32 to vector<16x128xf32>
      %511 = arith.mulf %510, %509 : vector<16x128xf32>
      %512 = arith.addf %507, %511 : vector<16x128xf32>
      %c94 = arith.constant 94 : index
      %513 = memref.load %arg2[%c94] : memref<98xf32, #tpu.memory_space<smem>>
      %514 = vector.broadcast %513 : f32 to vector<16x128xf32>
      %515 = arith.mulf %514, %497 : vector<16x128xf32>
      %516 = arith.addf %512, %515 : vector<16x128xf32>
      %c95 = arith.constant 95 : index
      %517 = memref.load %arg2[%c95] : memref<98xf32, #tpu.memory_space<smem>>
      %c127_i32_147 = arith.constant 127 : i32
      %518 = tpu.dynamic_rotate %497 by %c127_i32_147 dim 1 : vector<16x128xf32>, i32 -> vector<16x128xf32>
      %519 = vector.broadcast %517 : f32 to vector<16x128xf32>
      %520 = arith.mulf %519, %518 : vector<16x128xf32>
      %521 = arith.addf %516, %520 : vector<16x128xf32>
      %c96 = arith.constant 96 : index
      %522 = memref.load %arg2[%c96] : memref<98xf32, #tpu.memory_space<smem>>
      %c126_i32_148 = arith.constant 126 : i32
      %523 = tpu.dynamic_rotate %497 by %c126_i32_148 dim 1 : vector<16x128xf32>, i32 -> vector<16x128xf32>
      %524 = vector.broadcast %522 : f32 to vector<16x128xf32>
      %525 = arith.mulf %524, %523 : vector<16x128xf32>
      %526 = arith.addf %521, %525 : vector<16x128xf32>
      %c97 = arith.constant 97 : index
      %527 = memref.load %arg2[%c97] : memref<98xf32, #tpu.memory_space<smem>>
      %c125_i32_149 = arith.constant 125 : i32
      %528 = tpu.dynamic_rotate %497 by %c125_i32_149 dim 1 : vector<16x128xf32>, i32 -> vector<16x128xf32>
      %529 = vector.broadcast %527 : f32 to vector<16x128xf32>
      %530 = arith.mulf %529, %528 : vector<16x128xf32>
      %531 = arith.addf %526, %530 : vector<16x128xf32>
      %532 = arith.addf %278, %531 : vector<16x128xf32>
      %533 = arith.negf %532 : vector<16x128xf32>
      %534 = math.exp %533 : vector<16x128xf32>
      %cst_150 = arith.constant 1.000000e+00 : f32
      %535 = vector.broadcast %cst_150 : f32 to vector<16x128xf32>
      %536 = arith.addf %535, %534 : vector<16x128xf32>
      %537 = arith.divf %535, %536 : vector<16x128xf32>
      %c0_151 = arith.constant 0 : index
      %c0_152 = arith.constant 0 : index
      %c0_153 = arith.constant 0 : index
      %538 = vector.load %arg4[%c0_151, %c0_152, %c0_153] : memref<1x16x128xf32, #tpu.memory_space<vmem>>, vector<1x16x128xf32>
      %539 = vector.shape_cast %538 : vector<1x16x128xf32> to vector<16x128xf32>
      %540 = vector.shape_cast %537 : vector<16x128xf32> to vector<1x16x128xf32>
      tpu.vector_store %arg4[%c0_151, %c0_152, %c0_153], %540 {strides = array<i32>} : memref<1x16x128xf32, #tpu.memory_space<vmem>>, vector<1x16x128xf32>,
    } else {
    }
    return
  }
  func.func @transform_0(%arg0: i32, %arg1: i32) -> i32 {
    %c0_i32 = arith.constant 0 : i32
    %c0_i32_0 = arith.constant 0 : i32
    return %c0_i32 : i32
  }
  func.func @transform_1(%arg0: i32, %arg1: i32) -> (i32, i32, i32, i32) {
    %c0_i32 = arith.constant 0 : i32
    %c0_i32_0 = arith.constant 0 : i32
    %c0_i32_1 = arith.constant 0 : i32
    return %arg0, %arg1, %c0_i32, %c0_i32_0 : i32, i32, i32, i32
  }
  func.func @transform_2(%arg0: i32, %arg1: i32) -> (i32, i32, i32) {
    %c0_i32 = arith.constant 0 : i32
    %c0_i32_0 = arith.constant 0 : i32
    %c0_i32_1 = arith.constant 0 : i32
    return %arg0, %c0_i32, %c0_i32_0 : i32, i32, i32
  }
}

</mosaic_0001>

<llo_original>
// kernel: tpu_custom_call.1
$region0: #{tpu_custom_call.1}
  #allocation0 [shape = 'u32[]', space=smem, size = 0x4, offset = 0x4, fixed_abs, tag = 'smem constant byte address 0x4 - core index']
  #allocation1 [shape = 'u32[72,128]{1,0:T(1,128)}', space=vmem, size = 0x9000, scoped, tag = 'internal scratch']
  #allocation2 [shape = 'f32[16,16]{1,0:T(8,128)}', space=vmem, size = 0x2000, scoped, tag = 'scratch operand']
  #allocation3 [shape = 'f32[16,16]{1,0:T(8,128)}', space=vmem, size = 0x2000, scoped, tag = 'scratch operand']
  #allocation4 [shape = 'f32[2,24,128]{2,1,0:T(8,128)}', space=vmem, size = 0x6000, scoped, tag = 'scratch operand']
  %s0 = inlined_call_operand.hbm [shape: f32[98], index: 0, kind: input, shape index: {}]
  %s1 = inlined_call_operand.hbm [shape: f32[2,4,16,16], index: 1, kind: input, shape index: {}]
  %s2 = inlined_call_operand.hbm [shape: f32[2,16,128], index: 2, kind: output, shape index: {}]
  %s3 = sld [smem:[#allocation0]]
  $region64: #{tpu_custom_call.1} parent=0
    _
  %s5 = ssub.s32 1, %s3
  %s6 = scalar_select 0, %s5, %s3
  $region1: #{tpu_custom_call.1} parent=0
    #allocation5 [shape = 'u8[512]{0}', space=smem, size = 0x200, scoped, tag = 'input window, operand 0, single buffered']
    #allocation6 [shape = 's32[2]{0}', space=sflag, size = 0x8, scoped, tag = 'scoped memory for tpu_custom_call.1']
    #allocation7 [shape = 's32[2]{0}', space=sflag, size = 0x8, scoped, tag = 'scoped memory for tpu_custom_call.1']
    #allocation8 [shape = 's32[2]{0}', space=sflag, size = 0x8, scoped, tag = 'scoped memory for tpu_custom_call.1']
    #allocation9 [shape = 'u8[65536]{0}', space=vmem, size = 0x10000, scoped, tag = 'input window, operand 1']
    #allocation10 [shape = 'u8[16384]{0}', space=vmem, size = 0x4000, scoped, tag = 'output window, operand 0']
    %7 = vsyncpa [#allocation8], 0
    %8 = vsyncpa [#allocation6], 0
    %s9 = scalar_lea.sflag [#allocation6], 1
    %10 = vsyncpa %s9, 0
    %11 = vsyncpa [#allocation7], 0
    %s12 = scalar_lea.sflag [#allocation7], 1
    %13 = vsyncpa %s12, 0
    loop: start=0, step=1, limit=4
    $region2: #{tpu_custom_call.1} parent=1 // loop_pre_header
      _
    $region3: #{tpu_custom_call.1} parent=1 // loop_header
      %s15 = sphi 0, %s19
      %p16 = scmp.ge.s32.totalorder %s15, 4
      %s22 = sphi 0, %s34
      %s23 = sphi 0, %s30
      %s24 = sphi 0, %s22
      %s25 = sphi 0, %s23
      %s26 = sphi 0, %s24
      %s27 = sphi 0, %s25
      %s35 = sphi 0, %s35
      %s37 = sphi 0, %s35
      %s38 = sphi 0, %s37
      %s52 = sphi 0, %s38
      %s60 = sphi 0, %s62
      %s63 = sphi 0, %s60
      %s64 = sphi 0, %s63
      %s80 = sphi 0, %s64
      %s86 = sphi 0, %s88
      %s89 = sphi 0, %s86
      %s90 = sphi 0, %s89
      %s106 = sphi 0, %s90
    $region4: #{tpu_custom_call.1} parent=1 // loop_header_branch
      %18 = sbr.rel (%p16) target = $region8
    $region5: #{tpu_custom_call.1} parent=1 // loop_body
      %s20 = ssub.s32 %s15, 1
      %s21 = ssub.s32 %s15, 2
      %s28 = sadd.s32 1, %s23
      %p29 = scmp.ge.s32.totalorder %s28, 1
      %s30 = scalar_select %p29, 0, %s28
      %s31 = sadd.s32 1, %s22
      %s32 = scalar_select %p29, %s31, %s22
      %p33 = scmp.ge.s32.totalorder %s32, 2
      %s34 = scalar_select %p33, 0, %s32
      %s36 = sadd.s32 %s35, 1
      %p39 = scmp.eq.s32.totalorder %s15, 1
      %p40 = scmp.ne.s32.totalorder %s35, %s37
      %p41 = scmp.eq.s32.totalorder %s15, 0
      %p42 = por %p40, %p41
      %p43 = scmp.ne.s32.totalorder %s35, %s37
      %p44 = scmp.eq.s32.totalorder %s20, 1
      %p45 = por %p43, %p44
      %p46 = scmp.ne.s32.totalorder %s37, %s38
      %p47 = scmp.eq.s32.totalorder %s20, 0
      %p48 = por %p46, %p47
      %p49 = scmp.ne.s32.totalorder %s37, %s38
      %p50 = scmp.eq.s32.totalorder %s21, 1
      %p51 = por %p49, %p50
      %p53 = scmp.ne.s32.totalorder %s38, %s52
      %p54 = scmp.eq.s32.totalorder %s21, 0
      %p55 = por %p53, %p54
      %s56 = ssub.s32 %s22, %s34
      %s57 = ssub.s32 %s23, %s30
      %s58 = sor.u32 %s56, %s57
      %p59 = scmp.eq.s32.totalorder %s58, 0
      %s61 = sadd.s32 %s60, 1
      %s62 = scalar_select %p59, %s60, %s61
      %p65 = pneg %p59
      %p66 = scmp.eq.s32.totalorder %s15, 1
      %p67 = por %p65, %p66
      %p68 = scmp.ne.s32.totalorder %s60, %s63
      %p69 = scmp.eq.s32.totalorder %s15, 0
      %p70 = por %p68, %p69
      %p71 = scmp.ne.s32.totalorder %s60, %s63
      %p72 = scmp.eq.s32.totalorder %s20, 1
      %p73 = por %p71, %p72
      %p74 = scmp.ne.s32.totalorder %s63, %s64
      %p75 = scmp.eq.s32.totalorder %s20, 0
      %p76 = por %p74, %p75
      %p77 = scmp.ne.s32.totalorder %s63, %s64
      %p78 = scmp.eq.s32.totalorder %s21, 1
      %p79 = por %p77, %p78
      %p81 = scmp.ne.s32.totalorder %s64, %s80
      %p82 = scmp.eq.s32.totalorder %s21, 0
      %p83 = por %p81, %p82
      %s84 = ssub.s32 %s22, %s34
      %p85 = scmp.eq.s32.totalorder %s84, 0
      %s87 = sadd.s32 %s86, 1
      %s88 = scalar_select %p85, %s86, %s87
      %p91 = pneg %p85
      %p92 = scmp.eq.s32.totalorder %s15, 1
      %p93 = por %p91, %p92
      %p94 = scmp.ne.s32.totalorder %s86, %s89
      %p95 = scmp.eq.s32.totalorder %s15, 0
      %p96 = por %p94, %p95
      %p97 = scmp.ne.s32.totalorder %s86, %s89
      %p98 = scmp.eq.s32.totalorder %s20, 1
      %p99 = por %p97, %p98
      %p100 = scmp.ne.s32.totalorder %s89, %s90
      %p101 = scmp.eq.s32.totalorder %s20, 0
      %p102 = por %p100, %p101
      %p103 = scmp.ne.s32.totalorder %s89, %s90
      %p104 = scmp.eq.s32.totalorder %s21, 1
      %p105 = por %p103, %p104
      %p107 = scmp.ne.s32.totalorder %s90, %s106
      %p108 = scmp.eq.s32.totalorder %s21, 0
      %p109 = por %p107, %p108
      %p110 = scmp.le.s32.totalorder 1, %s15
      %p111 = scmp.lt.s32.totalorder %s15, 3
      %p112 = pnand %p110, %p111
      %p113 = pneg %p112
      // Predicated region
      $region9: #{tpu_custom_call.1} parent=5 // pred_check
        _
      $region10: #{tpu_custom_call.1} parent=5 // pred_check_branch
        %115 = sbr.rel (%p112) target = $region12
      $region11: #{tpu_custom_call.1} parent=5 // pred_region
        %s116 = ssub.s32 %s15, 1
        // Predicated region
        $region13: #{tpu_custom_call.1} parent=11 // pred_check
          %p117 = pneg %p48
        $region14: #{tpu_custom_call.1} parent=11 // pred_check_branch
          %119 = sbr.rel (%p117) target = $region16
        $region15: #{tpu_custom_call.1} parent=11 // pred_region
          %121 = vsyncadd [#allocation8], 0
          %s123 = sshll.u32 %s0, 4
          %s124 = int_to_ptr.hbm [resolvable:$true] %s123
          %126 = dma.hbm_to_smem %s124, 16, [#allocation5], [#allocation8]
        $region16: #{tpu_custom_call.1} parent=11 // pred_fallthru
          _
      $region12: #{tpu_custom_call.1} parent=5 // pred_fallthru
        _
      %p127 = scmp.lt.s32.totalorder %s15, 2
      // Predicated region
      $region17: #{tpu_custom_call.1} parent=5 // pred_check
        %p128 = pneg %p127
      $region18: #{tpu_custom_call.1} parent=5 // pred_check_branch
        %130 = sbr.rel (%p128) target = $region20
      $region19: #{tpu_custom_call.1} parent=5 // pred_region
        // Predicated region
        $region21: #{tpu_custom_call.1} parent=19 // pred_check
          %p131 = pneg %p70
        $region22: #{tpu_custom_call.1} parent=19 // pred_check_branch
          %133 = sbr.rel (%p131) target = $region24
        $region23: #{tpu_custom_call.1} parent=19 // pred_region
          %s134 = sand.u32 %s60, 1
          %s135 = scalar_lea.sflag [#allocation6], %s134
          %s136 = sand.u32 %s60, 1
          %s137 = smul.addr %s136, 64
          %s138 = scalar_lea.vmem [#allocation9], %s137
          %s139 = smul.u32 4, %s23
          %141 = vsyncadd %s135, 0
          %s142 = smul.addr %s139, 2
          %s143 = smul.addr %s22, 8
          %s144 = sadd.s32 %s142, %s143
          %s145 = smul.addr %s144, 8
          %s146 = scalar_lea.hbm %s1, %s145
          %s147 = sshll.u32 %s146, 4
          %s148 = int_to_ptr.hbm [resolvable:$true] %s147
          %s149 = sshll.u32 %s138, 4
          %s150 = int_to_ptr.vmem [resolvable:$true] %s149
          %155 = dma.hbm_to_vmem [thread:$0]  %s148, 1024, %s150, %s135, 128, 128, 8
        $region24: #{tpu_custom_call.1} parent=19 // pred_fallthru
          _
      $region20: #{tpu_custom_call.1} parent=5 // pred_fallthru
        _
      %p156 = scmp.le.s32.totalorder 1, %s15
      %p157 = scmp.lt.s32.totalorder %s15, 3
      %p158 = pnand %p156, %p157
      %p159 = pneg %p158
      // Predicated region
      $region25: #{tpu_custom_call.1} parent=5 // pred_check
        _
      $region26: #{tpu_custom_call.1} parent=5 // pred_check_branch
        %161 = sbr.rel (%p158) target = $region28
      $region27: #{tpu_custom_call.1} parent=5 // pred_region
        %s162 = ssub.s32 %s15, 1
        // Predicated region
        $region29: #{tpu_custom_call.1} parent=27 // pred_check
          %p163 = pneg %p48
        $region30: #{tpu_custom_call.1} parent=27 // pred_check_branch
          %165 = sbr.rel (%p163) target = $region32
        $region31: #{tpu_custom_call.1} parent=27 // pred_region
          %167 = dma.done [#allocation8], 16
        $region32: #{tpu_custom_call.1} parent=27 // pred_fallthru
          _
        %s168 = sand.u32 %s63, 1
        %s169 = scalar_lea.sflag [#allocation6], %s168
        %s170 = sand.u32 %s63, 1
        %s171 = smul.addr %s170, 64
        %s172 = scalar_lea.vmem [#allocation9], %s171
        // Predicated region
        $region33: #{tpu_custom_call.1} parent=27 // pred_check
          %p173 = pneg %p76
        $region34: #{tpu_custom_call.1} parent=27 // pred_check_branch
          %175 = sbr.rel (%p173) target = $region36
        $region35: #{tpu_custom_call.1} parent=27 // pred_region
          %177 = dma.done %s169, 1024
        $region36: #{tpu_custom_call.1} parent=27 // pred_fallthru
          _
        %178 = sfence
        %p179 = pneg %p48
        %p180 = pneg %p45
        %s181 = sand.u32 %s63, 1
        %s182 = scalar_lea.sflag [#allocation6], %s181
        %s183 = sand.u32 %s63, 1
        %s184 = smul.addr %s183, 64
        %s185 = scalar_lea.vmem [#allocation9], %s184
        %p186 = pneg %p76
        %p187 = pneg %p73
        %p188 = pneg %p102
        %p189 = pneg %p99
        %s190 = sand.u32 %s89, 1
        %s191 = scalar_lea.sflag [#allocation7], %s190
        %s192 = sand.u32 %s89, 1
        %s193 = smul.addr %s192, 16
        %s194 = scalar_lea.vmem [#allocation10], %s193
        %s195 = smul.u32 4, %s25
        %p196 = scmp.eq.s32.totalorder %s25, 0
        // Predicated region
        $region37: #{tpu_custom_call.1} parent=27 // pred_check
          %p197 = pneg %p196
        $region38: #{tpu_custom_call.1} parent=27 // pred_check_branch
          %199 = sbr.rel (%p197) target = $region40
        $region39: #{tpu_custom_call.1} parent=27 // pred_region
          %vm200 = vcmask 130048
          %201 = vst.msk [vmem:[#allocation2] sm:$0xff] %vm200, 0.0
          %202 = vst.msk [vmem:[#allocation2 + $0x8] sm:$0xff] %vm200, 0.0
          %203 = vst.msk [vmem:[#allocation3] sm:$0xff] %vm200, -inf
          %204 = vst.msk [vmem:[#allocation3 + $0x8] sm:$0xff] %vm200, -inf
        $region40: #{tpu_custom_call.1} parent=27 // pred_fallthru
          _
        %s205 = smul.u32 %s25, 4
        %s206 = ssub.s32 4, %s205
        %p207 = scmp.lt.s32.totalorder %s206, 4
        %s208 = scalar_select %p207, %s206, 4
        %v209 = vld [vmem:[#allocation2] sm:$0xff]
        %v210 = vld [vmem:[#allocation2 + $0x8] sm:$0xff]
        %v211 = vld [vmem:[#allocation3] sm:$0xff]
        %v212 = vld [vmem:[#allocation3 + $0x8] sm:$0xff]
        // While loop
        $region41: #{tpu_custom_call.1} parent=27 // loop_pre_header
          _
        $region42: #{tpu_custom_call.1} parent=27 // loop_header
          %s214 = sphi 0, %s216
          %p215 = scmp.ge.s32.totalorder %s214, %s208
          %v219 = vphi %v209, %v227
          %v220 = vphi %v210, %v228
          %v221 = vphi %v211, %v229
          %v222 = vphi %v212, %v230
        $region43: #{tpu_custom_call.1} parent=27 // loop_header_branch
          %218 = sbr.rel (%p215) target = $region47
        $region44: #{tpu_custom_call.1} parent=27 // loop_body
          %s223 = smul.u32 %s214, 16
          %s224 = scalar_lea.vmem %s172, %s223 [#allocation9]
          %v225 = vld [vmem:[%s224] sm:$0xff]
          %v226 = vld [vmem:[%s224 + $0x8] sm:$0xff]
          %v227 = vadd.f32 %v219, %v225
          %v228 = vadd.f32 %v220, %v226
          %v229 = vmax.f32 %v221, %v225
          %v230 = vmax.f32 %v222, %v226
        $region45: #{tpu_custom_call.1} parent=27 // loop_footer
          %s216 = sadd.s32 %s214, 1
        $region46: #{tpu_custom_call.1} parent=27 // loop_footer_branch
          %213 = sbr.rel target = $region42
        $region47: #{tpu_custom_call.1} parent=27 // loop_exit
          _
        %vm231 = vcmask 130048
        %232 = vst.msk [vmem:[#allocation2] sm:$0xff] %vm231, %v219
        %233 = vst.msk [vmem:[#allocation2 + $0x8] sm:$0xff] %vm231, %v220
        %234 = vst.msk [vmem:[#allocation3] sm:$0xff] %vm231, %v221
        %235 = vst.msk [vmem:[#allocation3 + $0x8] sm:$0xff] %vm231, %v222
        // Predicated region
        $region48: #{tpu_custom_call.1} parent=27 // pred_check
          %p236 = pneg %p196
        $region49: #{tpu_custom_call.1} parent=27 // pred_check_branch
          %238 = sbr.rel (%p236) target = $region51
        $region50: #{tpu_custom_call.1} parent=27 // pred_region
          %239 = vst [vmem:[#allocation4] sm:$0xff] 0.0
          %240 = vst [vmem:[#allocation4 + $0x8] sm:$0xff] 0.0
          %241 = vst [vmem:[#allocation4 + $0x10] sm:$0xff] 0.0
          %242 = vst [vmem:[#allocation4 + $0x18] sm:$0xff] 0.0
          %243 = vst [vmem:[#allocation4 + $0x20] sm:$0xff] 0.0
          %244 = vst [vmem:[#allocation4 + $0x28] sm:$0xff] 0.0
          %v245 = vld [vmem:[#allocation2] sm:$0xff]
          %v246 = vld [vmem:[#allocation2 + $0x8] sm:$0xff]
          %247 = vst.msk [vmem:[#allocation4 + $0x3] sm:$0xff] %vm231, %v245
          %248 = vst.msk [vmem:[#allocation4 + $0xb] sm:$0xff] %vm231, %v246
          %v249 = vld [vmem:[#allocation3] sm:$0xff]
          %v250 = vld [vmem:[#allocation3 + $0x8] sm:$0xff]
          %s251 = scalar_lea.vmem [#allocation4], 24
          %252 = vst.msk [vmem:[%s251 + $0x3] sm:$0xff] %vm231, %v249
          %253 = vst.msk [vmem:[%s251 + $0xb] sm:$0xff] %vm231, %v250
          %v254 = vld [vmem:[#allocation4] sm:$0xff]
          %v255 = vld [vmem:[#allocation4 + $0x8] sm:$0xff]
          %s256 = sld [smem:[#allocation5]]
          %257 = vrot.lane.b32.xlu0 %v254, 3
          %v258 = vpop.permute.xlu0 %257
          %259 = vrot.lane.b32.xlu0 %v255, 3
          %v260 = vpop.permute.xlu0 %259
          %v261 = vstv %s256
          %v262 = vmul.f32 %v261, %v258
          %v263 = vmul.f32 %v261, %v260
          %v264 = vadd.f32 %v262, 0.0
          %v265 = vadd.f32 %v263, 0.0
          %s266 = sld [smem:[#allocation5 + $0x1]]
          %267 = vrot.lane.b32.xlu0 %v254, 2
          %v268 = vpop.permute.xlu0 %267
          %269 = vrot.lane.b32.xlu0 %v255, 2
          %v270 = vpop.permute.xlu0 %269
          %v271 = vstv %s266
          %v272 = vmul.f32 %v271, %v268
          %v273 = vmul.f32 %v271, %v270
          %v274 = vadd.f32 %v264, %v272
          %v275 = vadd.f32 %v265, %v273
          %s276 = sld [smem:[#allocation5 + $0x2]]
          %277 = vrot.lane.b32.xlu0 %v254, 1
          %v278 = vpop.permute.xlu0 %277
          %279 = vrot.lane.b32.xlu0 %v255, 1
          %v280 = vpop.permute.xlu0 %279
          %v281 = vstv %s276
          %v282 = vmul.f32 %v281, %v278
          %v283 = vmul.f32 %v281, %v280
          %v284 = vadd.f32 %v274, %v282
          %v285 = vadd.f32 %v275, %v283
          %s286 = sld [smem:[#allocation5 + $0x3]]
          %v287 = vstv %s286
          %v288 = vmul.f32 %v287, %v254
          %v289 = vmul.f32 %v287, %v255
          %v290 = vadd.f32 %v284, %v288
          %v291 = vadd.f32 %v285, %v289
          %s292 = sld [smem:[#allocation5 + $0x4]]
          %293 = vrot.lane.b32.xlu0 %v254, 127
          %v294 = vpop.permute.xlu0 %293
          %295 = vrot.lane.b32.xlu0 %v255, 127
          %v296 = vpop.permute.xlu0 %295
          %v297 = vstv %s292
          %v298 = vmul.f32 %v297, %v294
          %v299 = vmul.f32 %v297, %v296
          %v300 = vadd.f32 %v290, %v298
          %v301 = vadd.f32 %v291, %v299
          %s302 = sld [smem:[#allocation5 + $0x5]]
          %303 = vrot.lane.b32.xlu0 %v254, 126
          %v304 = vpop.permute.xlu0 %303
          %305 = vrot.lane.b32.xlu0 %v255, 126
          %v306 = vpop.permute.xlu0 %305
          %v307 = vstv %s302
          %v308 = vmul.f32 %v307, %v304
          %v309 = vmul.f32 %v307, %v306
          %v310 = vadd.f32 %v300, %v308
          %v311 = vadd.f32 %v301, %v309
          %s312 = sld [smem:[#allocation5 + $0x6]]
          %313 = vrot.lane.b32.xlu0 %v254, 125
          %v314 = vpop.permute.xlu0 %313
          %315 = vrot.lane.b32.xlu0 %v255, 125
          %v316 = vpop.permute.xlu0 %315
          %v317 = vstv %s312
          %v318 = vmul.f32 %v317, %v314
          %v319 = vmul.f32 %v317, %v316
          %v320 = vadd.f32 %v310, %v318
          %v321 = vadd.f32 %v311, %v319
          %v322 = vld [vmem:[#allocation4 + $0x1] sm:$0xff]
          %v323 = vld [vmem:[#allocation4 + $0x9] sm:$0xff]
          %s324 = sld [smem:[#allocation5 + $0x7]]
          %325 = vrot.lane.b32.xlu0 %v322, 3
          %v326 = vpop.permute.xlu0 %325
          %327 = vrot.lane.b32.xlu0 %v323, 3
          %v328 = vpop.permute.xlu0 %327
          %v329 = vstv %s324
          %v330 = vmul.f32 %v329, %v326
          %v331 = vmul.f32 %v329, %v328
          %v332 = vadd.f32 %v320, %v330
          %v333 = vadd.f32 %v321, %v331
          %s334 = sld [smem:[#allocation5 + $0x8]]
          %335 = vrot.lane.b32.xlu0 %v322, 2
          %v336 = vpop.permute.xlu0 %335
          %337 = vrot.lane.b32.xlu0 %v323, 2
          %v338 = vpop.permute.xlu0 %337
          %v339 = vstv %s334
          %v340 = vmul.f32 %v339, %v336
          %v341 = vmul.f32 %v339, %v338
          %v342 = vadd.f32 %v332, %v340
          %v343 = vadd.f32 %v333, %v341
          %s344 = sld [smem:[#allocation5 + $0x9]]
          %345 = vrot.lane.b32.xlu0 %v322, 1
          %v346 = vpop.permute.xlu0 %345
          %347 = vrot.lane.b32.xlu0 %v323, 1
          %v348 = vpop.permute.xlu0 %347
          %v349 = vstv %s344
          %v350 = vmul.f32 %v349, %v346
          %v351 = vmul.f32 %v349, %v348
          %v352 = vadd.f32 %v342, %v350
          %v353 = vadd.f32 %v343, %v351
          %s354 = sld [smem:[#allocation5 + $0xa]]
          %v355 = vstv %s354
          %v356 = vmul.f32 %v355, %v322
          %v357 = vmul.f32 %v355, %v323
          %v358 = vadd.f32 %v352, %v356
          %v359 = vadd.f32 %v353, %v357
          %s360 = sld [smem:[#allocation5 + $0xb]]
          %361 = vrot.lane.b32.xlu0 %v322, 127
          %v362 = vpop.permute.xlu0 %361
          %363 = vrot.lane.b32.xlu0 %v323, 127
          %v364 = vpop.permute.xlu0 %363
          %v365 = vstv %s360
          %v366 = vmul.f32 %v365, %v362
          %v367 = vmul.f32 %v365, %v364
          %v368 = vadd.f32 %v358, %v366
          %v369 = vadd.f32 %v359, %v367
          %s370 = sld [smem:[#allocation5 + $0xc]]
          %371 = vrot.lane.b32.xlu0 %v322, 126
          %v372 = vpop.permute.xlu0 %371
          %373 = vrot.lane.b32.xlu0 %v323, 126
          %v374 = vpop.permute.xlu0 %373
          %v375 = vstv %s370
          %v376 = vmul.f32 %v375, %v372
          %v377 = vmul.f32 %v375, %v374
          %v378 = vadd.f32 %v368, %v376
          %v379 = vadd.f32 %v369, %v377
          %s380 = sld [smem:[#allocation5 + $0xd]]
          %381 = vrot.lane.b32.xlu0 %v322, 125
          %v382 = vpop.permute.xlu0 %381
          %383 = vrot.lane.b32.xlu0 %v323, 125
          %v384 = vpop.permute.xlu0 %383
          %v385 = vstv %s380
          %v386 = vmul.f32 %v385, %v382
          %v387 = vmul.f32 %v385, %v384
          %v388 = vadd.f32 %v378, %v386
          %v389 = vadd.f32 %v379, %v387
          %v390 = vld [vmem:[#allocation4 + $0x2] sm:$0xff]
          %v391 = vld [vmem:[#allocation4 + $0xa] sm:$0xff]
          %s392 = sld [smem:[#allocation5 + $0xe]]
          %393 = vrot.lane.b32.xlu0 %v390, 3
          %v394 = vpop.permute.xlu0 %393
          %395 = vrot.lane.b32.xlu0 %v391, 3
          %v396 = vpop.permute.xlu0 %395
          %v397 = vstv %s392
          %v398 = vmul.f32 %v397, %v394
          %v399 = vmul.f32 %v397, %v396
          %v400 = vadd.f32 %v388, %v398
          %v401 = vadd.f32 %v389, %v399
          %s402 = sld [smem:[#allocation5 + $0xf]]
          %403 = vrot.lane.b32.xlu0 %v390, 2
          %v404 = vpop.permute.xlu0 %403
          %405 = vrot.lane.b32.xlu0 %v391, 2
          %v406 = vpop.permute.xlu0 %405
          %v407 = vstv %s402
          %v408 = vmul.f32 %v407, %v404
          %v409 = vmul.f32 %v407, %v406
          %v410 = vadd.f32 %v400, %v408
          %v411 = vadd.f32 %v401, %v409
          %s412 = sld [smem:[#allocation5 + $0x10]]
          %413 = vrot.lane.b32.xlu0 %v390, 1
          %v414 = vpop.permute.xlu0 %413
          %415 = vrot.lane.b32.xlu0 %v391, 1
          %v416 = vpop.permute.xlu0 %415
          %v417 = vstv %s412
          %v418 = vmul.f32 %v417, %v414
          %v419 = vmul.f32 %v417, %v416
          %v420 = vadd.f32 %v410, %v418
          %v421 = vadd.f32 %v411, %v419
          %s422 = sld [smem:[#allocation5 + $0x11]]
          %v423 = vstv %s422
          %v424 = vmul.f32 %v423, %v390
          %v425 = vmul.f32 %v423, %v391
          %v426 = vadd.f32 %v420, %v424
          %v427 = vadd.f32 %v421, %v425
          %s428 = sld [smem:[#allocation5 + $0x12]]
          %429 = vrot.lane.b32.xlu0 %v390, 127
          %v430 = vpop.permute.xlu0 %429
          %431 = vrot.lane.b32.xlu0 %v391, 127
          %v432 = vpop.permute.xlu0 %431
          %v433 = vstv %s428
          %v434 = vmul.f32 %v433, %v430
          %v435 = vmul.f32 %v433, %v432
          %v436 = vadd.f32 %v426, %v434
          %v437 = vadd.f32 %v427, %v435
          %s438 = sld [smem:[#allocation5 + $0x13]]
          %439 = vrot.lane.b32.xlu0 %v390, 126
          %v440 = vpop.permute.xlu0 %439
          %441 = vrot.lane.b32.xlu0 %v391, 126
          %v442 = vpop.permute.xlu0 %441
          %v443 = vstv %s438
          %v444 = vmul.f32 %v443, %v440
          %v445 = vmul.f32 %v443, %v442
          %v446 = vadd.f32 %v436, %v444
          %v447 = vadd.f32 %v437, %v445
          %s448 = sld [smem:[#allocation5 + $0x14]]
          %449 = vrot.lane.b32.xlu0 %v390, 125
          %v450 = vpop.permute.xlu0 %449
          %451 = vrot.lane.b32.xlu0 %v391, 125
          %v452 = vpop.permute.xlu0 %451
          %v453 = vstv %s448
          %v454 = vmul.f32 %v453, %v450
          %v455 = vmul.f32 %v453, %v452
          %v456 = vadd.f32 %v446, %v454
          %v457 = vadd.f32 %v447, %v455
          %v458 = vld [vmem:[#allocation4 + $0x3] sm:$0xff]
          %v459 = vld [vmem:[#allocation4 + $0xb] sm:$0xff]
          %s460 = sld [smem:[#allocation5 + $0x15]]
          %461 = vrot.lane.b32.xlu0 %v458, 3
          %v462 = vpop.permute.xlu0 %461
          %463 = vrot.lane.b32.xlu0 %v459, 3
          %v464 = vpop.permute.xlu0 %463
          %v465 = vstv %s460
          %v466 = vmul.f32 %v465, %v462
          %v467 = vmul.f32 %v465, %v464
          %v468 = vadd.f32 %v456, %v466
          %v469 = vadd.f32 %v457, %v467
          %s470 = sld [smem:[#allocation5 + $0x16]]
          %471 = vrot.lane.b32.xlu0 %v458, 2
          %v472 = vpop.permute.xlu0 %471
          %473 = vrot.lane.b32.xlu0 %v459, 2
          %v474 = vpop.permute.xlu0 %473
          %v475 = vstv %s470
          %v476 = vmul.f32 %v475, %v472
          %v477 = vmul.f32 %v475, %v474
          %v478 = vadd.f32 %v468, %v476
          %v479 = vadd.f32 %v469, %v477
          %s480 = sld [smem:[#allocation5 + $0x17]]
          %481 = vrot.lane.b32.xlu0 %v458, 1
          %v482 = vpop.permute.xlu0 %481
          %483 = vrot.lane.b32.xlu0 %v459, 1
          %v484 = vpop.permute.xlu0 %483
          %v485 = vstv %s480
          %v486 = vmul.f32 %v485, %v482
          %v487 = vmul.f32 %v485, %v484
          %v488 = vadd.f32 %v478, %v486
          %v489 = vadd.f32 %v479, %v487
          %s490 = sld [smem:[#allocation5 + $0x18]]
          %v491 = vstv %s490
          %v492 = vmul.f32 %v491, %v458
          %v493 = vmul.f32 %v491, %v459
          %v494 = vadd.f32 %v488, %v492
          %v495 = vadd.f32 %v489, %v493
          %s496 = sld [smem:[#allocation5 + $0x19]]
          %497 = vrot.lane.b32.xlu0 %v458, 127
          %v498 = vpop.permute.xlu0 %497
          %499 = vrot.lane.b32.xlu0 %v459, 127
          %v500 = vpop.permute.xlu0 %499
          %v501 = vstv %s496
          %v502 = vmul.f32 %v501, %v498
          %v503 = vmul.f32 %v501, %v500
          %v504 = vadd.f32 %v494, %v502
          %v505 = vadd.f32 %v495, %v503
          %s506 = sld [smem:[#allocation5 + $0x1a]]
          %507 = vrot.lane.b32.xlu0 %v458, 126
          %v508 = vpop.permute.xlu0 %507
          %509 = vrot.lane.b32.xlu0 %v459, 126
          %v510 = vpop.permute.xlu0 %509
          %v511 = vstv %s506
          %v512 = vmul.f32 %v511, %v508
          %v513 = vmul.f32 %v511, %v510
          %v514 = vadd.f32 %v504, %v512
          %v515 = vadd.f32 %v505, %v513
          %s516 = sld [smem:[#allocation5 + $0x1b]]
          %517 = vrot.lane.b32.xlu0 %v458, 125
          %v518 = vpop.permute.xlu0 %517
          %519 = vrot.lane.b32.xlu0 %v459, 125
          %v520 = vpop.permute.xlu0 %519
          %v521 = vstv %s516
          %v522 = vmul.f32 %v521, %v518
          %v523 = vmul.f32 %v521, %v520
          %v524 = vadd.f32 %v514, %v522
          %v525 = vadd.f32 %v515, %v523
          %v526 = vld [vmem:[#allocation4 + $0x4] sm:$0xff]
          %v527 = vld [vmem:[#allocation4 + $0xc] sm:$0xff]
          %s528 = sld [smem:[#allocation5 + $0x1c]]
          %529 = vrot.lane.b32.xlu0 %v526, 3
          %v530 = vpop.permute.xlu0 %529
          %531 = vrot.lane.b32.xlu0 %v527, 3
          %v532 = vpop.permute.xlu0 %531
          %v533 = vstv %s528
          %v534 = vmul.f32 %v533, %v530
          %v535 = vmul.f32 %v533, %v532
          %v536 = vadd.f32 %v524, %v534
          %v537 = vadd.f32 %v525, %v535
          %s538 = sld [smem:[#allocation5 + $0x1d]]
          %539 = vrot.lane.b32.xlu0 %v526, 2
          %v540 = vpop.permute.xlu0 %539
          %541 = vrot.lane.b32.xlu0 %v527, 2
          %v542 = vpop.permute.xlu0 %541
          %v543 = vstv %s538
          %v544 = vmul.f32 %v543, %v540
          %v545 = vmul.f32 %v543, %v542
          %v546 = vadd.f32 %v536, %v544
          %v547 = vadd.f32 %v537, %v545
          %s548 = sld [smem:[#allocation5 + $0x1e]]
          %549 = vrot.lane.b32.xlu0 %v526, 1
          %v550 = vpop.permute.xlu0 %549
          %551 = vrot.lane.b32.xlu0 %v527, 1
          %v552 = vpop.permute.xlu0 %551
          %v553 = vstv %s548
          %v554 = vmul.f32 %v553, %v550
          %v555 = vmul.f32 %v553, %v552
          %v556 = vadd.f32 %v546, %v554
          %v557 = vadd.f32 %v547, %v555
          %s558 = sld [smem:[#allocation5 + $0x1f]]
          %v559 = vstv %s558
          %v560 = vmul.f32 %v559, %v526
          %v561 = vmul.f32 %v559, %v527
          %v562 = vadd.f32 %v556, %v560
          %v563 = vadd.f32 %v557, %v561
          %s564 = sld [smem:[#allocation5 + $0x20]]
          %565 = vrot.lane.b32.xlu0 %v526, 127
          %v566 = vpop.permute.xlu0 %565
          %567 = vrot.lane.b32.xlu0 %v527, 127
          %v568 = vpop.permute.xlu0 %567
          %v569 = vstv %s564
          %v570 = vmul.f32 %v569, %v566
          %v571 = vmul.f32 %v569, %v568
          %v572 = vadd.f32 %v562, %v570
          %v573 = vadd.f32 %v563, %v571
          %s574 = sld [smem:[#allocation5 + $0x21]]
          %575 = vrot.lane.b32.xlu0 %v526, 126
          %v576 = vpop.permute.xlu0 %575
          %577 = vrot.lane.b32.xlu0 %v527, 126
          %v578 = vpop.permute.xlu0 %577
          %v579 = vstv %s574
          %v580 = vmul.f32 %v579, %v576
          %v581 = vmul.f32 %v579, %v578
          %v582 = vadd.f32 %v572, %v580
          %v583 = vadd.f32 %v573, %v581
          %s584 = sld [smem:[#allocation5 + $0x22]]
          %585 = vrot.lane.b32.xlu0 %v526, 125
          %v586 = vpop.permute.xlu0 %585
          %587 = vrot.lane.b32.xlu0 %v527, 125
          %v588 = vpop.permute.xlu0 %587
          %v589 = vstv %s584
          %v590 = vmul.f32 %v589, %v586
          %v591 = vmul.f32 %v589, %v588
          %v592 = vadd.f32 %v582, %v590
          %v593 = vadd.f32 %v583, %v591
          %v594 = vld [vmem:[#allocation4 + $0x5] sm:$0xff]
          %v595 = vld [vmem:[#allocation4 + $0xd] sm:$0xff]
          %s596 = sld [smem:[#allocation5 + $0x23]]
          %597 = vrot.lane.b32.xlu0 %v594, 3
          %v598 = vpop.permute.xlu0 %597
          %599 = vrot.lane.b32.xlu0 %v595, 3
          %v600 = vpop.permute.xlu0 %599
          %v601 = vstv %s596
          %v602 = vmul.f32 %v601, %v598
          %v603 = vmul.f32 %v601, %v600
          %v604 = vadd.f32 %v592, %v602
          %v605 = vadd.f32 %v593, %v603
          %s606 = sld [smem:[#allocation5 + $0x24]]
          %607 = vrot.lane.b32.xlu0 %v594, 2
          %v608 = vpop.permute.xlu0 %607
          %609 = vrot.lane.b32.xlu0 %v595, 2
          %v610 = vpop.permute.xlu0 %609
          %v611 = vstv %s606
          %v612 = vmul.f32 %v611, %v608
          %v613 = vmul.f32 %v611, %v610
          %v614 = vadd.f32 %v604, %v612
          %v615 = vadd.f32 %v605, %v613
          %s616 = sld [smem:[#allocation5 + $0x25]]
          %617 = vrot.lane.b32.xlu0 %v594, 1
          %v618 = vpop.permute.xlu0 %617
          %619 = vrot.lane.b32.xlu0 %v595, 1
          %v620 = vpop.permute.xlu0 %619
          %v621 = vstv %s616
          %v622 = vmul.f32 %v621, %v618
          %v623 = vmul.f32 %v621, %v620
          %v624 = vadd.f32 %v614, %v622
          %v625 = vadd.f32 %v615, %v623
          %s626 = sld [smem:[#allocation5 + $0x26]]
          %v627 = vstv %s626
          %v628 = vmul.f32 %v627, %v594
          %v629 = vmul.f32 %v627, %v595
          %v630 = vadd.f32 %v624, %v628
          %v631 = vadd.f32 %v625, %v629
          %s632 = sld [smem:[#allocation5 + $0x27]]
          %633 = vrot.lane.b32.xlu0 %v594, 127
          %v634 = vpop.permute.xlu0 %633
          %635 = vrot.lane.b32.xlu0 %v595, 127
          %v636 = vpop.permute.xlu0 %635
          %v637 = vstv %s632
          %v638 = vmul.f32 %v637, %v634
          %v639 = vmul.f32 %v637, %v636
          %v640 = vadd.f32 %v630, %v638
          %v641 = vadd.f32 %v631, %v639
          %s642 = sld [smem:[#allocation5 + $0x28]]
          %643 = vrot.lane.b32.xlu0 %v594, 126
          %v644 = vpop.permute.xlu0 %643
          %645 = vrot.lane.b32.xlu0 %v595, 126
          %v646 = vpop.permute.xlu0 %645
          %v647 = vstv %s642
          %v648 = vmul.f32 %v647, %v644
          %v649 = vmul.f32 %v647, %v646
          %v650 = vadd.f32 %v640, %v648
          %v651 = vadd.f32 %v641, %v649
          %s652 = sld [smem:[#allocation5 + $0x29]]
          %653 = vrot.lane.b32.xlu0 %v594, 125
          %v654 = vpop.permute.xlu0 %653
          %655 = vrot.lane.b32.xlu0 %v595, 125
          %v656 = vpop.permute.xlu0 %655
          %v657 = vstv %s652
          %v658 = vmul.f32 %v657, %v654
          %v659 = vmul.f32 %v657, %v656
          %v660 = vadd.f32 %v650, %v658
          %v661 = vadd.f32 %v651, %v659
          %v662 = vld [vmem:[#allocation4 + $0x6] sm:$0xff]
          %v663 = vld [vmem:[#allocation4 + $0xe] sm:$0xff]
          %s664 = sld [smem:[#allocation5 + $0x2a]]
          %665 = vrot.lane.b32.xlu0 %v662, 3
          %v666 = vpop.permute.xlu0 %665
          %667 = vrot.lane.b32.xlu0 %v663, 3
          %v668 = vpop.permute.xlu0 %667
          %v669 = vstv %s664
          %v670 = vmul.f32 %v669, %v666
          %v671 = vmul.f32 %v669, %v668
          %v672 = vadd.f32 %v660, %v670
          %v673 = vadd.f32 %v661, %v671
          %s674 = sld [smem:[#allocation5 + $0x2b]]
          %675 = vrot.lane.b32.xlu0 %v662, 2
          %v676 = vpop.permute.xlu0 %675
          %677 = vrot.lane.b32.xlu0 %v663, 2
          %v678 = vpop.permute.xlu0 %677
          %v679 = vstv %s674
          %v680 = vmul.f32 %v679, %v676
          %v681 = vmul.f32 %v679, %v678
          %v682 = vadd.f32 %v672, %v680
          %v683 = vadd.f32 %v673, %v681
          %s684 = sld [smem:[#allocation5 + $0x2c]]
          %685 = vrot.lane.b32.xlu0 %v662, 1
          %v686 = vpop.permute.xlu0 %685
          %687 = vrot.lane.b32.xlu0 %v663, 1
          %v688 = vpop.permute.xlu0 %687
          %v689 = vstv %s684
          %v690 = vmul.f32 %v689, %v686
          %v691 = vmul.f32 %v689, %v688
          %v692 = vadd.f32 %v682, %v690
          %v693 = vadd.f32 %v683, %v691
          %s694 = sld [smem:[#allocation5 + $0x2d]]
          %v695 = vstv %s694
          %v696 = vmul.f32 %v695, %v662
          %v697 = vmul.f32 %v695, %v663
          %v698 = vadd.f32 %v692, %v696
          %v699 = vadd.f32 %v693, %v697
          %s700 = sld [smem:[#allocation5 + $0x2e]]
          %701 = vrot.lane.b32.xlu0 %v662, 127
          %v702 = vpop.permute.xlu0 %701
          %703 = vrot.lane.b32.xlu0 %v663, 127
          %v704 = vpop.permute.xlu0 %703
          %v705 = vstv %s700
          %v706 = vmul.f32 %v705, %v702
          %v707 = vmul.f32 %v705, %v704
          %v708 = vadd.f32 %v698, %v706
          %v709 = vadd.f32 %v699, %v707
          %s710 = sld [smem:[#allocation5 + $0x2f]]
          %711 = vrot.lane.b32.xlu0 %v662, 126
          %v712 = vpop.permute.xlu0 %711
          %713 = vrot.lane.b32.xlu0 %v663, 126
          %v714 = vpop.permute.xlu0 %713
          %v715 = vstv %s710
          %v716 = vmul.f32 %v715, %v712
          %v717 = vmul.f32 %v715, %v714
          %v718 = vadd.f32 %v708, %v716
          %v719 = vadd.f32 %v709, %v717
          %s720 = sld [smem:[#allocation5 + $0x30]]
          %721 = vrot.lane.b32.xlu0 %v662, 125
          %v722 = vpop.permute.xlu0 %721
          %723 = vrot.lane.b32.xlu0 %v663, 125
          %v724 = vpop.permute.xlu0 %723
          %v725 = vstv %s720
          %v726 = vmul.f32 %v725, %v722
          %v727 = vmul.f32 %v725, %v724
          %v728 = vadd.f32 %v718, %v726
          %v729 = vadd.f32 %v719, %v727
          %v730 = vld [vmem:[%s251] sm:$0xff]
          %v731 = vld [vmem:[%s251 + $0x8] sm:$0xff]
          %s732 = sld [smem:[#allocation5 + $0x31]]
          %733 = vrot.lane.b32.xlu0 %v730, 3
          %v734 = vpop.permute.xlu0 %733
          %735 = vrot.lane.b32.xlu0 %v731, 3
          %v736 = vpop.permute.xlu0 %735
          %v737 = vstv %s732
          %v738 = vmul.f32 %v737, %v734
          %v739 = vmul.f32 %v737, %v736
          %v740 = vadd.f32 %v738, 0.0
          %v741 = vadd.f32 %v739, 0.0
          %s742 = sld [smem:[#allocation5 + $0x32]]
          %743 = vrot.lane.b32.xlu0 %v730, 2
          %v744 = vpop.permute.xlu0 %743
          %745 = vrot.lane.b32.xlu0 %v731, 2
          %v746 = vpop.permute.xlu0 %745
          %v747 = vstv %s742
          %v748 = vmul.f32 %v747, %v744
          %v749 = vmul.f32 %v747, %v746
          %v750 = vadd.f32 %v740, %v748
          %v751 = vadd.f32 %v741, %v749
          %s752 = sld [smem:[#allocation5 + $0x33]]
          %753 = vrot.lane.b32.xlu0 %v730, 1
          %v754 = vpop.permute.xlu0 %753
          %755 = vrot.lane.b32.xlu0 %v731, 1
          %v756 = vpop.permute.xlu0 %755
          %v757 = vstv %s752
          %v758 = vmul.f32 %v757, %v754
          %v759 = vmul.f32 %v757, %v756
          %v760 = vadd.f32 %v750, %v758
          %v761 = vadd.f32 %v751, %v759
          %s762 = sld [smem:[#allocation5 + $0x34]]
          %v763 = vstv %s762
          %v764 = vmul.f32 %v763, %v730
          %v765 = vmul.f32 %v763, %v731
          %v766 = vadd.f32 %v760, %v764
          %v767 = vadd.f32 %v761, %v765
          %s768 = sld [smem:[#allocation5 + $0x35]]
          %769 = vrot.lane.b32.xlu0 %v730, 127
          %v770 = vpop.permute.xlu0 %769
          %771 = vrot.lane.b32.xlu0 %v731, 127
          %v772 = vpop.permute.xlu0 %771
          %v773 = vstv %s768
          %v774 = vmul.f32 %v773, %v770
          %v775 = vmul.f32 %v773, %v772
          %v776 = vadd.f32 %v766, %v774
          %v777 = vadd.f32 %v767, %v775
          %s778 = sld [smem:[#allocation5 + $0x36]]
          %779 = vrot.lane.b32.xlu0 %v730, 126
          %v780 = vpop.permute.xlu0 %779
          %781 = vrot.lane.b32.xlu0 %v731, 126
          %v782 = vpop.permute.xlu0 %781
          %v783 = vstv %s778
          %v784 = vmul.f32 %v783, %v780
          %v785 = vmul.f32 %v783, %v782
          %v786 = vadd.f32 %v776, %v784
          %v787 = vadd.f32 %v777, %v785
          %s788 = sld [smem:[#allocation5 + $0x37]]
          %789 = vrot.lane.b32.xlu0 %v730, 125
          %v790 = vpop.permute.xlu0 %789
          %791 = vrot.lane.b32.xlu0 %v731, 125
          %v792 = vpop.permute.xlu0 %791
          %v793 = vstv %s788
          %v794 = vmul.f32 %v793, %v790
          %v795 = vmul.f32 %v793, %v792
          %v796 = vadd.f32 %v786, %v794
          %v797 = vadd.f32 %v787, %v795
          %v798 = vld [vmem:[%s251 + $0x1] sm:$0xff]
          %v799 = vld [vmem:[%s251 + $0x9] sm:$0xff]
          %s800 = sld [smem:[#allocation5 + $0x38]]
          %801 = vrot.lane.b32.xlu0 %v798, 3
          %v802 = vpop.permute.xlu0 %801
          %803 = vrot.lane.b32.xlu0 %v799, 3
          %v804 = vpop.permute.xlu0 %803
          %v805 = vstv %s800
          %v806 = vmul.f32 %v805, %v802
          %v807 = vmul.f32 %v805, %v804
          %v808 = vadd.f32 %v796, %v806
          %v809 = vadd.f32 %v797, %v807
          %s810 = sld [smem:[#allocation5 + $0x39]]
          %811 = vrot.lane.b32.xlu0 %v798, 2
          %v812 = vpop.permute.xlu0 %811
          %813 = vrot.lane.b32.xlu0 %v799, 2
          %v814 = vpop.permute.xlu0 %813
          %v815 = vstv %s810
          %v816 = vmul.f32 %v815, %v812
          %v817 = vmul.f32 %v815, %v814
          %v818 = vadd.f32 %v808, %v816
          %v819 = vadd.f32 %v809, %v817
          %s820 = sld [smem:[#allocation5 + $0x3a]]
          %821 = vrot.lane.b32.xlu0 %v798, 1
          %v822 = vpop.permute.xlu0 %821
          %823 = vrot.lane.b32.xlu0 %v799, 1
          %v824 = vpop.permute.xlu0 %823
          %v825 = vstv %s820
          %v826 = vmul.f32 %v825, %v822
          %v827 = vmul.f32 %v825, %v824
          %v828 = vadd.f32 %v818, %v826
          %v829 = vadd.f32 %v819, %v827
          %s830 = sld [smem:[#allocation5 + $0x3b]]
          %v831 = vstv %s830
          %v832 = vmul.f32 %v831, %v798
          %v833 = vmul.f32 %v831, %v799
          %v834 = vadd.f32 %v828, %v832
          %v835 = vadd.f32 %v829, %v833
          %s836 = sld [smem:[#allocation5 + $0x3c]]
          %837 = vrot.lane.b32.xlu0 %v798, 127
          %v838 = vpop.permute.xlu0 %837
          %839 = vrot.lane.b32.xlu0 %v799, 127
          %v840 = vpop.permute.xlu0 %839
          %v841 = vstv %s836
          %v842 = vmul.f32 %v841, %v838
          %v843 = vmul.f32 %v841, %v840
          %v844 = vadd.f32 %v834, %v842
          %v845 = vadd.f32 %v835, %v843
          %s846 = sld [smem:[#allocation5 + $0x3d]]
          %847 = vrot.lane.b32.xlu0 %v798, 126
          %v848 = vpop.permute.xlu0 %847
          %849 = vrot.lane.b32.xlu0 %v799, 126
          %v850 = vpop.permute.xlu0 %849
          %v851 = vstv %s846
          %v852 = vmul.f32 %v851, %v848
          %v853 = vmul.f32 %v851, %v850
          %v854 = vadd.f32 %v844, %v852
          %v855 = vadd.f32 %v845, %v853
          %s856 = sld [smem:[#allocation5 + $0x3e]]
          %857 = vrot.lane.b32.xlu0 %v798, 125
          %v858 = vpop.permute.xlu0 %857
          %859 = vrot.lane.b32.xlu0 %v799, 125
          %v860 = vpop.permute.xlu0 %859
          %v861 = vstv %s856
          %v862 = vmul.f32 %v861, %v858
          %v863 = vmul.f32 %v861, %v860
          %v864 = vadd.f32 %v854, %v862
          %v865 = vadd.f32 %v855, %v863
          %v866 = vld [vmem:[%s251 + $0x2] sm:$0xff]
          %v867 = vld [vmem:[%s251 + $0xa] sm:$0xff]
          %s868 = sld [smem:[#allocation5 + $0x3f]]
          %869 = vrot.lane.b32.xlu0 %v866, 3
          %v870 = vpop.permute.xlu0 %869
          %871 = vrot.lane.b32.xlu0 %v867, 3
          %v872 = vpop.permute.xlu0 %871
          %v873 = vstv %s868
          %v874 = vmul.f32 %v873, %v870
          %v875 = vmul.f32 %v873, %v872
          %v876 = vadd.f32 %v864, %v874
          %v877 = vadd.f32 %v865, %v875
          %s878 = sld [smem:[#allocation5 + $0x40]]
          %879 = vrot.lane.b32.xlu0 %v866, 2
          %v880 = vpop.permute.xlu0 %879
          %881 = vrot.lane.b32.xlu0 %v867, 2
          %v882 = vpop.permute.xlu0 %881
          %v883 = vstv %s878
          %v884 = vmul.f32 %v883, %v880
          %v885 = vmul.f32 %v883, %v882
          %v886 = vadd.f32 %v876, %v884
          %v887 = vadd.f32 %v877, %v885
          %s888 = sld [smem:[#allocation5 + $0x41]]
          %889 = vrot.lane.b32.xlu0 %v866, 1
          %v890 = vpop.permute.xlu0 %889
          %891 = vrot.lane.b32.xlu0 %v867, 1
          %v892 = vpop.permute.xlu0 %891
          %v893 = vstv %s888
          %v894 = vmul.f32 %v893, %v890
          %v895 = vmul.f32 %v893, %v892
          %v896 = vadd.f32 %v886, %v894
          %v897 = vadd.f32 %v887, %v895
          %s898 = sld [smem:[#allocation5 + $0x42]]
          %v899 = vstv %s898
          %v900 = vmul.f32 %v899, %v866
          %v901 = vmul.f32 %v899, %v867
          %v902 = vadd.f32 %v896, %v900
          %v903 = vadd.f32 %v897, %v901
          %s904 = sld [smem:[#allocation5 + $0x43]]
          %905 = vrot.lane.b32.xlu0 %v866, 127
          %v906 = vpop.permute.xlu0 %905
          %907 = vrot.lane.b32.xlu0 %v867, 127
          %v908 = vpop.permute.xlu0 %907
          %v909 = vstv %s904
          %v910 = vmul.f32 %v909, %v906
          %v911 = vmul.f32 %v909, %v908
          %v912 = vadd.f32 %v902, %v910
          %v913 = vadd.f32 %v903, %v911
          %s914 = sld [smem:[#allocation5 + $0x44]]
          %915 = vrot.lane.b32.xlu0 %v866, 126
          %v916 = vpop.permute.xlu0 %915
          %917 = vrot.lane.b32.xlu0 %v867, 126
          %v918 = vpop.permute.xlu0 %917
          %v919 = vstv %s914
          %v920 = vmul.f32 %v919, %v916
          %v921 = vmul.f32 %v919, %v918
          %v922 = vadd.f32 %v912, %v920
          %v923 = vadd.f32 %v913, %v921
          %s924 = sld [smem:[#allocation5 + $0x45]]
          %925 = vrot.lane.b32.xlu0 %v866, 125
          %v926 = vpop.permute.xlu0 %925
          %927 = vrot.lane.b32.xlu0 %v867, 125
          %v928 = vpop.permute.xlu0 %927
          %v929 = vstv %s924
          %v930 = vmul.f32 %v929, %v926
          %v931 = vmul.f32 %v929, %v928
          %v932 = vadd.f32 %v922, %v930
          %v933 = vadd.f32 %v923, %v931
          %v934 = vld [vmem:[%s251 + $0x3] sm:$0xff]
          %v935 = vld [vmem:[%s251 + $0xb] sm:$0xff]
          %s936 = sld [smem:[#allocation5 + $0x46]]
          %937 = vrot.lane.b32.xlu0 %v934, 3
          %v938 = vpop.permute.xlu0 %937
          %939 = vrot.lane.b32.xlu0 %v935, 3
          %v940 = vpop.permute.xlu0 %939
          %v941 = vstv %s936
          %v942 = vmul.f32 %v941, %v938
          %v943 = vmul.f32 %v941, %v940
          %v944 = vadd.f32 %v932, %v942
          %v945 = vadd.f32 %v933, %v943
          %s946 = sld [smem:[#allocation5 + $0x47]]
          %947 = vrot.lane.b32.xlu0 %v934, 2
          %v948 = vpop.permute.xlu0 %947
          %949 = vrot.lane.b32.xlu0 %v935, 2
          %v950 = vpop.permute.xlu0 %949
          %v951 = vstv %s946
          %v952 = vmul.f32 %v951, %v948
          %v953 = vmul.f32 %v951, %v950
          %v954 = vadd.f32 %v944, %v952
          %v955 = vadd.f32 %v945, %v953
          %s956 = sld [smem:[#allocation5 + $0x48]]
          %957 = vrot.lane.b32.xlu0 %v934, 1
          %v958 = vpop.permute.xlu0 %957
          %959 = vrot.lane.b32.xlu0 %v935, 1
          %v960 = vpop.permute.xlu0 %959
          %v961 = vstv %s956
          %v962 = vmul.f32 %v961, %v958
          %v963 = vmul.f32 %v961, %v960
          %v964 = vadd.f32 %v954, %v962
          %v965 = vadd.f32 %v955, %v963
          %s966 = sld [smem:[#allocation5 + $0x49]]
          %v967 = vstv %s966
          %v968 = vmul.f32 %v967, %v934
          %v969 = vmul.f32 %v967, %v935
          %v970 = vadd.f32 %v964, %v968
          %v971 = vadd.f32 %v965, %v969
          %s972 = sld [smem:[#allocation5 + $0x4a]]
          %973 = vrot.lane.b32.xlu0 %v934, 127
          %v974 = vpop.permute.xlu0 %973
          %975 = vrot.lane.b32.xlu0 %v935, 127
          %v976 = vpop.permute.xlu0 %975
          %v977 = vstv %s972
          %v978 = vmul.f32 %v977, %v974
          %v979 = vmul.f32 %v977, %v976
          %v980 = vadd.f32 %v970, %v978
          %v981 = vadd.f32 %v971, %v979
          %s982 = sld [smem:[#allocation5 + $0x4b]]
          %983 = vrot.lane.b32.xlu0 %v934, 126
          %v984 = vpop.permute.xlu0 %983
          %985 = vrot.lane.b32.xlu0 %v935, 126
          %v986 = vpop.permute.xlu0 %985
          %v987 = vstv %s982
          %v988 = vmul.f32 %v987, %v984
          %v989 = vmul.f32 %v987, %v986
          %v990 = vadd.f32 %v980, %v988
          %v991 = vadd.f32 %v981, %v989
          %s992 = sld [smem:[#allocation5 + $0x4c]]
          %993 = vrot.lane.b32.xlu0 %v934, 125
          %v994 = vpop.permute.xlu0 %993
          %995 = vrot.lane.b32.xlu0 %v935, 125
          %v996 = vpop.permute.xlu0 %995
          %v997 = vstv %s992
          %v998 = vmul.f32 %v997, %v994
          %v999 = vmul.f32 %v997, %v996
          %v1000 = vadd.f32 %v990, %v998
          %v1001 = vadd.f32 %v991, %v999
          %v1002 = vld [vmem:[%s251 + $0x4] sm:$0xff]
          %v1003 = vld [vmem:[%s251 + $0xc] sm:$0xff]
          %s1004 = sld [smem:[#allocation5 + $0x4d]]
          %1005 = vrot.lane.b32.xlu0 %v1002, 3
          %v1006 = vpop.permute.xlu0 %1005
          %1007 = vrot.lane.b32.xlu0 %v1003, 3
          %v1008 = vpop.permute.xlu0 %1007
          %v1009 = vstv %s1004
          %v1010 = vmul.f32 %v1009, %v1006
          %v1011 = vmul.f32 %v1009, %v1008
          %v1012 = vadd.f32 %v1000, %v1010
          %v1013 = vadd.f32 %v1001, %v1011
          %s1014 = sld [smem:[#allocation5 + $0x4e]]
          %1015 = vrot.lane.b32.xlu0 %v1002, 2
          %v1016 = vpop.permute.xlu0 %1015
          %1017 = vrot.lane.b32.xlu0 %v1003, 2
          %v1018 = vpop.permute.xlu0 %1017
          %v1019 = vstv %s1014
          %v1020 = vmul.f32 %v1019, %v1016
          %v1021 = vmul.f32 %v1019, %v1018
          %v1022 = vadd.f32 %v1012, %v1020
          %v1023 = vadd.f32 %v1013, %v1021
          %s1024 = sld [smem:[#allocation5 + $0x4f]]
          %1025 = vrot.lane.b32.xlu0 %v1002, 1
          %v1026 = vpop.permute.xlu0 %1025
          %1027 = vrot.lane.b32.xlu0 %v1003, 1
          %v1028 = vpop.permute.xlu0 %1027
          %v1029 = vstv %s1024
          %v1030 = vmul.f32 %v1029, %v1026
          %v1031 = vmul.f32 %v1029, %v1028
          %v1032 = vadd.f32 %v1022, %v1030
          %v1033 = vadd.f32 %v1023, %v1031
          %s1034 = sld [smem:[#allocation5 + $0x50]]
          %v1035 = vstv %s1034
          %v1036 = vmul.f32 %v1035, %v1002
          %v1037 = vmul.f32 %v1035, %v1003
          %v1038 = vadd.f32 %v1032, %v1036
          %v1039 = vadd.f32 %v1033, %v1037
          %s1040 = sld [smem:[#allocation5 + $0x51]]
          %1041 = vrot.lane.b32.xlu0 %v1002, 127
          %v1042 = vpop.permute.xlu0 %1041
          %1043 = vrot.lane.b32.xlu0 %v1003, 127
          %v1044 = vpop.permute.xlu0 %1043
          %v1045 = vstv %s1040
          %v1046 = vmul.f32 %v1045, %v1042
          %v1047 = vmul.f32 %v1045, %v1044
          %v1048 = vadd.f32 %v1038, %v1046
          %v1049 = vadd.f32 %v1039, %v1047
          %s1050 = sld [smem:[#allocation5 + $0x52]]
          %1051 = vrot.lane.b32.xlu0 %v1002, 126
          %v1052 = vpop.permute.xlu0 %1051
          %1053 = vrot.lane.b32.xlu0 %v1003, 126
          %v1054 = vpop.permute.xlu0 %1053
          %v1055 = vstv %s1050
          %v1056 = vmul.f32 %v1055, %v1052
          %v1057 = vmul.f32 %v1055, %v1054
          %v1058 = vadd.f32 %v1048, %v1056
          %v1059 = vadd.f32 %v1049, %v1057
          %s1060 = sld [smem:[#allocation5 + $0x53]]
          %1061 = vrot.lane.b32.xlu0 %v1002, 125
          %v1062 = vpop.permute.xlu0 %1061
          %1063 = vrot.lane.b32.xlu0 %v1003, 125
          %v1064 = vpop.permute.xlu0 %1063
          %v1065 = vstv %s1060
          %v1066 = vmul.f32 %v1065, %v1062
          %v1067 = vmul.f32 %v1065, %v1064
          %v1068 = vadd.f32 %v1058, %v1066
          %v1069 = vadd.f32 %v1059, %v1067
          %v1070 = vld [vmem:[%s251 + $0x5] sm:$0xff]
          %v1071 = vld [vmem:[%s251 + $0xd] sm:$0xff]
          %s1072 = sld [smem:[#allocation5 + $0x54]]
          %1073 = vrot.lane.b32.xlu0 %v1070, 3
          %v1074 = vpop.permute.xlu0 %1073
          %1075 = vrot.lane.b32.xlu0 %v1071, 3
          %v1076 = vpop.permute.xlu0 %1075
          %v1077 = vstv %s1072
          %v1078 = vmul.f32 %v1077, %v1074
          %v1079 = vmul.f32 %v1077, %v1076
          %v1080 = vadd.f32 %v1068, %v1078
          %v1081 = vadd.f32 %v1069, %v1079
          %s1082 = sld [smem:[#allocation5 + $0x55]]
          %1083 = vrot.lane.b32.xlu0 %v1070, 2
          %v1084 = vpop.permute.xlu0 %1083
          %1085 = vrot.lane.b32.xlu0 %v1071, 2
          %v1086 = vpop.permute.xlu0 %1085
          %v1087 = vstv %s1082
          %v1088 = vmul.f32 %v1087, %v1084
          %v1089 = vmul.f32 %v1087, %v1086
          %v1090 = vadd.f32 %v1080, %v1088
          %v1091 = vadd.f32 %v1081, %v1089
          %s1092 = sld [smem:[#allocation5 + $0x56]]
          %1093 = vrot.lane.b32.xlu0 %v1070, 1
          %v1094 = vpop.permute.xlu0 %1093
          %1095 = vrot.lane.b32.xlu0 %v1071, 1
          %v1096 = vpop.permute.xlu0 %1095
          %v1097 = vstv %s1092
          %v1098 = vmul.f32 %v1097, %v1094
          %v1099 = vmul.f32 %v1097, %v1096
          %v1100 = vadd.f32 %v1090, %v1098
          %v1101 = vadd.f32 %v1091, %v1099
          %s1102 = sld [smem:[#allocation5 + $0x57]]
          %v1103 = vstv %s1102
          %v1104 = vmul.f32 %v1103, %v1070
          %v1105 = vmul.f32 %v1103, %v1071
          %v1106 = vadd.f32 %v1100, %v1104
          %v1107 = vadd.f32 %v1101, %v1105
          %s1108 = sld [smem:[#allocation5 + $0x58]]
          %1109 = vrot.lane.b32.xlu0 %v1070, 127
          %v1110 = vpop.permute.xlu0 %1109
          %1111 = vrot.lane.b32.xlu0 %v1071, 127
          %v1112 = vpop.permute.xlu0 %1111
          %v1113 = vstv %s1108
          %v1114 = vmul.f32 %v1113, %v1110
          %v1115 = vmul.f32 %v1113, %v1112
          %v1116 = vadd.f32 %v1106, %v1114
          %v1117 = vadd.f32 %v1107, %v1115
          %s1118 = sld [smem:[#allocation5 + $0x59]]
          %1119 = vrot.lane.b32.xlu0 %v1070, 126
          %v1120 = vpop.permute.xlu0 %1119
          %1121 = vrot.lane.b32.xlu0 %v1071, 126
          %v1122 = vpop.permute.xlu0 %1121
          %v1123 = vstv %s1118
          %v1124 = vmul.f32 %v1123, %v1120
          %v1125 = vmul.f32 %v1123, %v1122
          %v1126 = vadd.f32 %v1116, %v1124
          %v1127 = vadd.f32 %v1117, %v1125
          %s1128 = sld [smem:[#allocation5 + $0x5a]]
          %1129 = vrot.lane.b32.xlu0 %v1070, 125
          %v1130 = vpop.permute.xlu0 %1129
          %1131 = vrot.lane.b32.xlu0 %v1071, 125
          %v1132 = vpop.permute.xlu0 %1131
          %v1133 = vstv %s1128
          %v1134 = vmul.f32 %v1133, %v1130
          %v1135 = vmul.f32 %v1133, %v1132
          %v1136 = vadd.f32 %v1126, %v1134
          %v1137 = vadd.f32 %v1127, %v1135
          %v1138 = vld [vmem:[%s251 + $0x6] sm:$0xff]
          %v1139 = vld [vmem:[%s251 + $0xe] sm:$0xff]
          %s1140 = sld [smem:[#allocation5 + $0x5b]]
          %1141 = vrot.lane.b32.xlu0 %v1138, 3
          %v1142 = vpop.permute.xlu0 %1141
          %1143 = vrot.lane.b32.xlu0 %v1139, 3
          %v1144 = vpop.permute.xlu0 %1143
          %v1145 = vstv %s1140
          %v1146 = vmul.f32 %v1145, %v1142
          %v1147 = vmul.f32 %v1145, %v1144
          %v1148 = vadd.f32 %v1136, %v1146
          %v1149 = vadd.f32 %v1137, %v1147
          %s1150 = sld [smem:[#allocation5 + $0x5c]]
          %1151 = vrot.lane.b32.xlu0 %v1138, 2
          %v1152 = vpop.permute.xlu0 %1151
          %1153 = vrot.lane.b32.xlu0 %v1139, 2
          %v1154 = vpop.permute.xlu0 %1153
          %v1155 = vstv %s1150
          %v1156 = vmul.f32 %v1155, %v1152
          %v1157 = vmul.f32 %v1155, %v1154
          %v1158 = vadd.f32 %v1148, %v1156
          %v1159 = vadd.f32 %v1149, %v1157
          %s1160 = sld [smem:[#allocation5 + $0x5d]]
          %1161 = vrot.lane.b32.xlu0 %v1138, 1
          %v1162 = vpop.permute.xlu0 %1161
          %1163 = vrot.lane.b32.xlu0 %v1139, 1
          %v1164 = vpop.permute.xlu0 %1163
          %v1165 = vstv %s1160
          %v1166 = vmul.f32 %v1165, %v1162
          %v1167 = vmul.f32 %v1165, %v1164
          %v1168 = vadd.f32 %v1158, %v1166
          %v1169 = vadd.f32 %v1159, %v1167
          %s1170 = sld [smem:[#allocation5 + $0x5e]]
          %v1171 = vstv %s1170
          %v1172 = vmul.f32 %v1171, %v1138
          %v1173 = vmul.f32 %v1171, %v1139
          %v1174 = vadd.f32 %v1168, %v1172
          %v1175 = vadd.f32 %v1169, %v1173
          %s1176 = sld [smem:[#allocation5 + $0x5f]]
          %1177 = vrot.lane.b32.xlu0 %v1138, 127
          %v1178 = vpop.permute.xlu0 %1177
          %1179 = vrot.lane.b32.xlu0 %v1139, 127
          %v1180 = vpop.permute.xlu0 %1179
          %v1181 = vstv %s1176
          %v1182 = vmul.f32 %v1181, %v1178
          %v1183 = vmul.f32 %v1181, %v1180
          %v1184 = vadd.f32 %v1174, %v1182
          %v1185 = vadd.f32 %v1175, %v1183
          %s1186 = sld [smem:[#allocation5 + $0x60]]
          %1187 = vrot.lane.b32.xlu0 %v1138, 126
          %v1188 = vpop.permute.xlu0 %1187
          %1189 = vrot.lane.b32.xlu0 %v1139, 126
          %v1190 = vpop.permute.xlu0 %1189
          %v1191 = vstv %s1186
          %v1192 = vmul.f32 %v1191, %v1188
          %v1193 = vmul.f32 %v1191, %v1190
          %v1194 = vadd.f32 %v1184, %v1192
          %v1195 = vadd.f32 %v1185, %v1193
          %s1196 = sld [smem:[#allocation5 + $0x61]]
          %1197 = vrot.lane.b32.xlu0 %v1138, 125
          %v1198 = vpop.permute.xlu0 %1197
          %1199 = vrot.lane.b32.xlu0 %v1139, 125
          %v1200 = vpop.permute.xlu0 %1199
          %v1201 = vstv %s1196
          %v1202 = vmul.f32 %v1201, %v1198
          %v1203 = vmul.f32 %v1201, %v1200
          %v1204 = vadd.f32 %v1194, %v1202
          %v1205 = vadd.f32 %v1195, %v1203
          %v1206 = vadd.f32 %v728, %v1204
          %v1207 = vadd.f32 %v729, %v1205
          %v1208 = vxor.u32 %v1206, 2147483648
          %v1209 = vxor.u32 %v1207, 2147483648
          %v1210 = vmul.f32 %v1208, 1.442695
          %v1211 = vpow.pop %v1210
          %v1212 = vmul.f32 %v1209, 1.442695
          %v1213 = vpow.pop %v1212
          %v1214 = vadd.f32 %v1211, 1.0
          %v1215 = vadd.f32 %v1213, 1.0
          %v1216 = vrcp.pop %v1214
          %v1217 = vmul.f32 %v1214, %v1216
          %v1218 = vsub.f32 1.0, %v1217
          %v1219 = vmul.f32 %v1216, %v1218
          %v1220 = vadd.f32 %v1216, %v1219
          %vm1221 = vweird.f32 %v1214
          %vm1222 = vweird.f32 %v1216
          %vm1223 = vmor %vm1221, %vm1222
          %v1224 = vsel %vm1223, %v1216, %v1220
          %v1225 = vand.u32 2147483647, %v1214
          %vm1226 = vcmp.eq.f32.partialorder %v1225, 8.507059e+37
          %v1227 = vand.u32 %v1214, 2147483648
          %v1228 = vor.u32 1.1754944e-38, %v1227
          %v1229 = vsel %vm1226, %v1228, %v1224
          %v1230 = vmul.f32 1.0, %v1229
          %v1231 = vrcp.pop %v1215
          %v1232 = vmul.f32 %v1215, %v1231
          %v1233 = vsub.f32 1.0, %v1232
          %v1234 = vmul.f32 %v1231, %v1233
          %v1235 = vadd.f32 %v1231, %v1234
          %vm1236 = vweird.f32 %v1215
          %vm1237 = vweird.f32 %v1231
          %vm1238 = vmor %vm1236, %vm1237
          %v1239 = vsel %vm1238, %v1231, %v1235
          %v1240 = vand.u32 2147483647, %v1215
          %vm1241 = vcmp.eq.f32.partialorder %v1240, 8.507059e+37
          %v1242 = vand.u32 %v1215, 2147483648
          %v1243 = vor.u32 1.1754944e-38, %v1242
          %v1244 = vsel %vm1241, %v1243, %v1239
          %v1245 = vmul.f32 1.0, %v1244
          %1246 = vst [vmem:[%s194] sm:$0xff] %v1230
          %1247 = vst [vmem:[%s194 + $0x8] sm:$0xff] %v1245
        $region51: #{tpu_custom_call.1} parent=27 // pred_fallthru
          _
        %s1248 = sand.u32 %s89, 1
        %s1249 = scalar_lea.sflag [#allocation7], %s1248
        %s1250 = sand.u32 %s89, 1
        %s1251 = smul.addr %s1250, 16
        %s1252 = scalar_lea.vmem [#allocation10], %s1251
        // Predicated region
        $region52: #{tpu_custom_call.1} parent=27 // pred_check
          %p1253 = pneg %p99
        $region53: #{tpu_custom_call.1} parent=27 // pred_check_branch
          %1255 = sbr.rel (%p1253) target = $region55
        $region54: #{tpu_custom_call.1} parent=27 // pred_region
          %1257 = vsyncadd %s1249, 0
          %s1258 = smul.addr %s24, 2
          %s1259 = smul.addr %s1258, 8
          %s1260 = scalar_lea.hbm %s2, %s1259
          %s1261 = sshll.u32 %s1252, 4
          %s1262 = int_to_ptr.vmem [resolvable:$true] %s1261
          %s1263 = sshll.u32 %s1260, 4
          %s1264 = int_to_ptr.hbm [resolvable:$true] %s1263
          %1269 = dma.vmem_to_hbm [thread:$0]  %s1262, 256, %s1264, %s1249, 128, 128, 8
        $region55: #{tpu_custom_call.1} parent=27 // pred_fallthru
          _
      $region28: #{tpu_custom_call.1} parent=5 // pred_fallthru
        _
      %p1270 = scmp.le.s32.totalorder 2, %s15
      // Predicated region
      $region56: #{tpu_custom_call.1} parent=5 // pred_check
        %p1271 = pneg %p1270
      $region57: #{tpu_custom_call.1} parent=5 // pred_check_branch
        %1273 = sbr.rel (%p1271) target = $region59
      $region58: #{tpu_custom_call.1} parent=5 // pred_region
        %s1274 = ssub.s32 %s15, 2
        // Predicated region
        $region60: #{tpu_custom_call.1} parent=58 // pred_check
          %p1275 = pneg %p105
        $region61: #{tpu_custom_call.1} parent=58 // pred_check_branch
          %1277 = sbr.rel (%p1275) target = $region63
        $region62: #{tpu_custom_call.1} parent=58 // pred_region
          %s1278 = sand.u32 %s90, 1
          %s1279 = scalar_lea.sflag [#allocation7], %s1278
          %s1280 = sand.u32 %s90, 1
          %s1281 = smul.addr %s1280, 16
          %s1282 = scalar_lea.vmem [#allocation10], %s1281
          %1284 = dma.done %s1279, 256
        $region63: #{tpu_custom_call.1} parent=58 // pred_fallthru
          _
      $region59: #{tpu_custom_call.1} parent=5 // pred_fallthru
        _
    $region6: #{tpu_custom_call.1} parent=1 // loop_footer
      %s19 = sadd.s32 1, %s15
    $region7: #{tpu_custom_call.1} parent=1 // loop_footer_branch
      %14 = sbr.rel target = $region3
    $region8: #{tpu_custom_call.1} parent=1 // loop_exit
      _
    %1285 = vsyncpa [#allocation6], 1
    %s1286 = scalar_lea.sflag [#allocation6], 1
    %1287 = vsyncpa %s1286, 1
    %1288 = vsyncpa [#allocation7], 1
    %s1289 = scalar_lea.sflag [#allocation7], 1
    %1290 = vsyncpa %s1289, 1
    %1291 = vsyncpa [#allocation8], 1
    %s1292 = scalar_lea.sflag [#allocation8], 1
    %1293 = vsyncpa %s1292, 1

</llo_original>
